<compile_context>
chip_gen: v5e
topology: v5e:2x2
jax: 0.10.0
libtpu: 0.0.40
codegen_flags: <defaults>
</compile_context>

<pallas_src>
import functools

import jax
import jax.numpy as jnp
from jax.experimental import pallas as pl
from jax.experimental.pallas import tpu as pltpu


def _round_up(v, m):
    return (v + m - 1) // m * m


def _largest_divisor_tile(total, unit, cap):
    """Largest multiple of `unit` that divides `total` and is <= cap, else `total`."""
    best = None
    t = unit
    cap = min(cap, total)
    while t <= cap:
        if total % t == 0:
            best = t
        t += unit
    return best if best is not None else total


# ---------------- Pallas kernels ----------------

def conv1x1_kernel(x_ref, w1_ref, b1_ref, w2_ref, b2_ref, o_ref):
    """Fused Conv2d(2K,64,1)+ReLU -> Conv2d(64,64,1)+ReLU for one (batch, HW-tile).

    x_ref: (1, Cin, thw) bf16   w1: (64, Cin) bf16   b1: (64, 1) f32
    o_ref: (1, 64, thw)  bf16   w2: (64, 64)  bf16   b2: (64, 1) f32
    """
    x = x_ref[0]                                                    # (Cin, thw)
    h = jnp.dot(w1_ref[...], x, preferred_element_type=jnp.float32)
    h = jnp.maximum(h + b1_ref[...], 0.0)                           # f32 bias+ReLU
    h = jnp.dot(w2_ref[...], h.astype(w2_ref.dtype),
                preferred_element_type=jnp.float32)
    o_ref[0] = jnp.maximum(h + b2_ref[...], 0.0).astype(o_ref.dtype)


def mlp_kernel(x_ref, w3_ref, b3_ref, w4_ref, b4_ref, o_ref, acc_ref):
    """Linear(F,4N)+ReLU+Linear(4N,2N); reduction over F is the grid axis.

    x_ref: (B, tk) bf16   w3: (tk, P4N) bf16   b3: (1, P4N) f32
    w4: (P4N, P2N) bf16   b4: (1, P2N) f32     o_ref: (B, P2N) f32
    acc_ref: (B, P4N) f32 scratch, resident across the reduction.
    """
    k = pl.program_id(0)

    @pl.when(k == 0)
    def _():
        acc_ref[...] = jnp.zeros_like(acc_ref)

    acc_ref[...] += jnp.dot(x_ref[...], w3_ref[...],
                            preferred_element_type=jnp.float32)

    @pl.when(k == pl.num_programs(0) - 1)
    def _():
        h = jnp.maximum(acc_ref[...] + b3_ref[...], 0.0)            # f32 bias+ReLU
        o_ref[...] = (jnp.dot(h.astype(w4_ref.dtype), w4_ref[...],
                              preferred_element_type=jnp.float32)
                      + b4_ref[...])


# ---------------- wrapper ----------------

@functools.partial(jax.jit, static_argnames=("M", "N", "K"))
def phase_net_forward(x, params, M, N, K):
    """x: (B, 2K, M, N+1) float32 NCHW (same as PyTorch). Returns (B, 2N) f32."""
    B = x.shape[0]
    Cin = 2 * K
    HW = M * (N + 1)
    F = 64 * HW
    P4N = params["w3"].shape[1]
    P2N = params["w4"].shape[1]

    # NCHW -> (B, Cin, H*W): a free reshape, no transpose.
    x3 = x.reshape(B, Cin, HW).astype(jnp.bfloat16)

    # --- conv stack: grid over (batch, HW tiles); HW sits on the lane axis. ---
    thw = _largest_divisor_tile(HW, 128, 1024)
    conv_out = pl.pallas_call(
        conv1x1_kernel,
        out_shape=jax.ShapeDtypeStruct((B, 64, HW), jnp.bfloat16),
        grid_spec=pltpu.PrefetchScalarGridSpec(
            num_scalar_prefetch=0,
            grid=(B, HW // thw),
            in_specs=[
                pl.BlockSpec((1, Cin, thw), lambda b, h: (b, 0, h)),
                pl.BlockSpec((64, Cin), lambda b, h: (0, 0)),    # resident weights
                pl.BlockSpec((64, 1), lambda b, h: (0, 0)),
                pl.BlockSpec((64, 64), lambda b, h: (0, 0)),
                pl.BlockSpec((64, 1), lambda b, h: (0, 0)),
            ],
            out_specs=pl.BlockSpec((1, 64, thw), lambda b, h: (b, 0, h)),
        ),
        compiler_params=pltpu.CompilerParams(
            dimension_semantics=("parallel", "parallel")),
    )(x3, params["w1"], params["b1"], params["w2"], params["b2"])

    # (B, 64, HW) -> (B, 64*HW): identical to PyTorch Flatten on NCHW, free.
    x_flat = conv_out.reshape(B, F)

    # --- MLP: stream w3 across the F reduction.  w3 tiles capped at ~2 MiB so
    # the double-buffered pipeline (plus resident w4 / acc) stays well inside
    # scoped VMEM on v5e/v6e/v7x alike. ---
    tk_cap = max(128, min(8192, (2 << 20) // (2 * P4N)))
    tk = _largest_divisor_tile(F, 128, tk_cap)
    out_pad = pl.pallas_call(
        mlp_kernel,
        out_shape=jax.ShapeDtypeStruct((B, P2N), jnp.float32),
        grid_spec=pltpu.PrefetchScalarGridSpec(
            num_scalar_prefetch=0,
            grid=(F // tk,),
            in_specs=[
                pl.BlockSpec((B, tk), lambda k: (0, k)),
                pl.BlockSpec((tk, P4N), lambda k: (k, 0)),       # streamed weight
                pl.BlockSpec((1, P4N), lambda k: (0, 0)),
                pl.BlockSpec((P4N, P2N), lambda k: (0, 0)),
                pl.BlockSpec((1, P2N), lambda k: (0, 0)),
            ],
            out_specs=pl.BlockSpec((B, P2N), lambda k: (0, 0)),
            scratch_shapes=[pltpu.VMEM((B, P4N), jnp.float32)],
        ),
        compiler_params=pltpu.CompilerParams(
            dimension_semantics=("arbitrary",),
            vmem_limit_bytes=32 * 1024 * 1024),
    )(x_flat, params["w3"], params["b3"], params["w4"], params["b4"])

    return out_pad[:, : 2 * N]


# ---------------- parameters ----------------

def init_params(key, M, N, K):
    """Raw f32 parameters (PyTorch default-init style). Linear weights are
    stored as (in, out); conv weights as (out, in) like PyTorch (squeezed)."""
    Cin = 2 * K
    F = 64 * M * (N + 1)
    ks = jax.random.split(key, 8)

    def u(k, shape, fan_in):
        bound = 1.0 / jnp.sqrt(jnp.float32(fan_in))
        return jax.random.uniform(k, shape, jnp.float32, -bound, bound)

    return dict(
        w1=u(ks[0], (64, Cin), Cin),        b1=u(ks[1], (64,), Cin),
        w2=u(ks[2], (64, 64), 64),          b2=u(ks[3], (64,), 64),
        w3=u(ks[4], (F, 4 * N), F),         b3=u(ks[5], (4 * N,), F),
        w4=u(ks[6], (4 * N, 2 * N), 4 * N), b4=u(ks[7], (2 * N,), 4 * N),
    )


def prepare_params(raw, M, N):
    """One-time conversion to the kernel layout: bf16 MXU weights, f32 biases,
    MLP hidden/output columns zero-padded up to multiples of 128 (lane-dense)."""
    P4N = _round_up(4 * N, 128)
    P2N = _round_up(2 * N, 128)
    F = raw["w3"].shape[0]
    w3 = jnp.zeros((F, P4N), jnp.float32).at[:, : 4 * N].set(raw["w3"])
    b3 = jnp.zeros((1, P4N), jnp.float32).at[0, : 4 * N].set(raw["b3"])
    w4 = jnp.zeros((P4N, P2N), jnp.float32).at[: 4 * N, : 2 * N].set(raw["w4"])
    b4 = jnp.zeros((1, P2N), jnp.float32).at[0, : 2 * N].set(raw["b4"])
    return dict(
        w1=raw["w1"].astype(jnp.bfloat16),
        b1=raw["b1"].reshape(64, 1).astype(jnp.float32),
        w2=raw["w2"].astype(jnp.bfloat16),
        b2=raw["b2"].reshape(64, 1).astype(jnp.float32),
        w3=w3.astype(jnp.bfloat16), b3=b3,
        w4=w4.astype(jnp.bfloat16), b4=b4,
    )


# ---------------- pure-JAX reference ----------------

def ref_forward(x, raw, M, N, K):
    """Matches the PyTorch module, with the same bf16 rounding of MXU inputs
    as the Pallas path (all accumulation / bias / ReLU in f32)."""
    bf = lambda a: a.astype(jnp.bfloat16).astype(jnp.float32)
    B = x.shape[0]
    h = jnp.einsum("oc,bchw->bohw", bf(raw["w1"]), bf(x)) + raw["b1"][None, :, None, None]
    h = jnp.maximum(h, 0.0)
    h = jnp.einsum("oc,bchw->bohw", bf(raw["w2"]), bf(h)) + raw["b2"][None, :, None, None]
    h = bf(jnp.maximum(h, 0.0))
    flat = h.reshape(B, -1)                     # NCHW flatten == PyTorch Flatten
    hh = jnp.maximum(flat @ bf(raw["w3"]) + raw["b3"], 0.0)
    return bf(hh) @ bf(raw["w4"]) + raw["b4"]


if __name__ == "__main__":
    M, N, K = 4, 8, 2          # spatial M x (N+1) = 4 x 9, channels 2K = 4
    B = 2

    key = jax.random.PRNGKey(0)
    k_x, k_p = jax.random.split(key)
    x = jax.random.normal(k_x, (B, 2 * K, M, N + 1), jnp.float32)

    raw = init_params(k_p, M, N, K)
    params = prepare_params(raw, M, N)

    out = phase_net_forward(x, params, M, N, K)
    out = jax.block_until_ready(out)

    ref = ref_forward(x, raw, M, N, K)
    assert out.shape == (B, 2 * N), out.shape
    max_err = float(jnp.max(jnp.abs(out - ref)))
    assert jnp.allclose(out, ref, rtol=1e-2, atol=1e-2), f"max abs err {max_err}"

    print("KERNEL_OK")
</pallas_src>

<mosaic_0001>
module attributes {stable_mosaic.version = 11 : i64} {
  func.func @conv1x1_kernel(%arg0: i32, %arg1: i32, %arg2: memref<1x4x36xbf16, #tpu.memory_space<vmem>>, %arg3: memref<64x4xbf16, #tpu.memory_space<vmem>>, %arg4: memref<64x1xf32, #tpu.memory_space<vmem>>, %arg5: memref<64x64xbf16, #tpu.memory_space<vmem>>, %arg6: memref<64x1xf32, #tpu.memory_space<vmem>>, %arg7: memref<1x64x36xbf16, #tpu.memory_space<vmem>>) attributes {dimension_semantics = [#tpu.dimension_semantics<parallel>, #tpu.dimension_semantics<parallel>], iteration_bounds = array<i64: 2, 1>, scalar_prefetch = 0 : i64, scratch_operands = 0 : i64, tpu.core_type = #tpu.core_type<tc>, window_params = [{transform_indices = @transform_0, window_bounds = array<i64: 1, 4, 36>}, {pipeline_mode = #tpu.pipeline_mode<synchronous>, transform_indices = @transform_1, window_bounds = array<i64: 64, 4>}, {pipeline_mode = #tpu.pipeline_mode<synchronous>, transform_indices = @transform_2, window_bounds = array<i64: 64, 1>}, {pipeline_mode = #tpu.pipeline_mode<synchronous>, transform_indices = @transform_3, window_bounds = array<i64: 64, 64>}, {pipeline_mode = #tpu.pipeline_mode<synchronous>, transform_indices = @transform_4, window_bounds = array<i64: 64, 1>}, {transform_indices = @transform_5, window_bounds = array<i64: 1, 64, 36>}]} {
    %c0 = arith.constant 0 : index
    %c0_0 = arith.constant 0 : index
    %c0_1 = arith.constant 0 : index
    %0 = vector.load %arg2[%c0, %c0_0, %c0_1] : memref<1x4x36xbf16, #tpu.memory_space<vmem>>, vector<1x4x36xbf16>
    %1 = vector.shape_cast %0 : vector<1x4x36xbf16> to vector<4x36xbf16>
    %c0_2 = arith.constant 0 : index
    %c0_3 = arith.constant 0 : index
    %2 = vector.load %arg3[%c0_2, %c0_3] : memref<64x4xbf16, #tpu.memory_space<vmem>>, vector<64x4xbf16>
    %cst = arith.constant dense<0.000000e+00> : vector<64x36xf32>
    %3 = tpu.matmul %2, %1, %cst {dimension_numbers = #tpu.dot_dimension_numbers<[1], [0], [0], [1], [0, 0, 1, 1], [], []>} : vector<64x4xbf16>, vector<4x36xbf16>, vector<64x36xf32> -> vector<64x36xf32>
    %c0_4 = arith.constant 0 : index
    %c0_5 = arith.constant 0 : index
    %4 = vector.load %arg4[%c0_4, %c0_5] : memref<64x1xf32, #tpu.memory_space<vmem>>, vector<64x1xf32>
    %5 = vector.broadcast %4 : vector<64x1xf32> to vector<64x36xf32>
    %6 = arith.addf %3, %5 : vector<64x36xf32>
    %cst_6 = arith.constant 0.000000e+00 : f32
    %7 = vector.broadcast %cst_6 : f32 to vector<64x36xf32>
    %8 = arith.maximumf %6, %7 : vector<64x36xf32>
    %c0_7 = arith.constant 0 : index
    %c0_8 = arith.constant 0 : index
    %9 = vector.load %arg5[%c0_7, %c0_8] : memref<64x64xbf16, #tpu.memory_space<vmem>>, vector<64x64xbf16>
    %10 = arith.truncf %8 : vector<64x36xf32> to vector<64x36xbf16>
    %cst_9 = arith.constant dense<0.000000e+00> : vector<64x36xf32>
    %11 = tpu.matmul %9, %10, %cst_9 {dimension_numbers = #tpu.dot_dimension_numbers<[1], [0], [0], [1], [0, 0, 1, 1], [], []>} : vector<64x64xbf16>, vector<64x36xbf16>, vector<64x36xf32> -> vector<64x36xf32>
    %c0_10 = arith.constant 0 : index
    %c0_11 = arith.constant 0 : index
    %12 = vector.load %arg6[%c0_10, %c0_11] : memref<64x1xf32, #tpu.memory_space<vmem>>, vector<64x1xf32>
    %13 = vector.broadcast %12 : vector<64x1xf32> to vector<64x36xf32>
    %14 = arith.addf %11, %13 : vector<64x36xf32>
    %cst_12 = arith.constant 0.000000e+00 : f32
    %15 = vector.broadcast %cst_12 : f32 to vector<64x36xf32>
    %16 = arith.maximumf %14, %15 : vector<64x36xf32>
    %17 = arith.truncf %16 : vector<64x36xf32> to vector<64x36xbf16>
    %c0_13 = arith.constant 0 : index
    %c0_14 = arith.constant 0 : index
    %c0_15 = arith.constant 0 : index
    %18 = vector.load %arg7[%c0_13, %c0_14, %c0_15] : memref<1x64x36xbf16, #tpu.memory_space<vmem>>, vector<1x64x36xbf16>
    %19 = vector.shape_cast %18 : vector<1x64x36xbf16> to vector<64x36xbf16>
    %20 = vector.shape_cast %17 : vector<64x36xbf16> to vector<1x64x36xbf16>
    tpu.vector_store %arg7[%c0_13, %c0_14, %c0_15], %20 {strides = array<i32>} : memref<1x64x36xbf16, #tpu.memory_space<vmem>>, vector<1x64x36xbf16>,
    return
  }
  func.func @transform_0(%arg0: i32, %arg1: i32) -> (i32, i32, i32) {
    %c0_i32 = arith.constant 0 : i32
    %c0_i32_0 = arith.constant 0 : i32
    return %arg0, %c0_i32, %arg1 : i32, i32, i32
  }
  func.func @transform_1(%arg0: i32, %arg1: i32) -> (i32, i32) {
    %c0_i32 = arith.constant 0 : i32
    %c0_i32_0 = arith.constant 0 : i32
    %c0_i32_1 = arith.constant 0 : i32
    return %c0_i32, %c0_i32_0 : i32, i32
  }
  func.func @transform_2(%arg0: i32, %arg1: i32) -> (i32, i32) {
    %c0_i32 = arith.constant 0 : i32
    %c0_i32_0 = arith.constant 0 : i32
    %c0_i32_1 = arith.constant 0 : i32
    return %c0_i32, %c0_i32_0 : i32, i32
  }
  func.func @transform_3(%arg0: i32, %arg1: i32) -> (i32, i32) {
    %c0_i32 = arith.constant 0 : i32
    %c0_i32_0 = arith.constant 0 : i32
    %c0_i32_1 = arith.constant 0 : i32
    return %c0_i32, %c0_i32_0 : i32, i32
  }
  func.func @transform_4(%arg0: i32, %arg1: i32) -> (i32, i32) {
    %c0_i32 = arith.constant 0 : i32
    %c0_i32_0 = arith.constant 0 : i32
    %c0_i32_1 = arith.constant 0 : i32
    return %c0_i32, %c0_i32_0 : i32, i32
  }
  func.func @transform_5(%arg0: i32, %arg1: i32) -> (i32, i32, i32) {
    %c0_i32 = arith.constant 0 : i32
    %c0_i32_0 = arith.constant 0 : i32
    return %arg0, %c0_i32, %arg1 : i32, i32, i32
  }
}

module attributes {stable_mosaic.version = 11 : i64} {
  func.func @mlp_kernel(%arg0: i32, %arg1: memref<2x2304xbf16, #tpu.memory_space<vmem>>, %arg2: memref<2304x128xbf16, #tpu.memory_space<vmem>>, %arg3: memref<1x128xf32, #tpu.memory_space<vmem>>, %arg4: memref<128x128xbf16, #tpu.memory_space<vmem>>, %arg5: memref<1x128xf32, #tpu.memory_space<vmem>>, %arg6: memref<2x128xf32, #tpu.memory_space<vmem>>, %arg7: memref<2x128xf32, #tpu.memory_space<vmem>>) attributes {dimension_semantics = [#tpu.dimension_semantics<arbitrary>], iteration_bounds = array<i64: 1>, scalar_prefetch = 0 : i64, scratch_operands = 1 : i64, tpu.core_type = #tpu.core_type<tc>, window_params = [{transform_indices = @transform_0, window_bounds = array<i64: 2, 2304>}, {transform_indices = @transform_1, window_bounds = array<i64: 2304, 128>}, {pipeline_mode = #tpu.pipeline_mode<synchronous>, transform_indices = @transform_2, window_bounds = array<i64: 1, 128>}, {pipeline_mode = #tpu.pipeline_mode<synchronous>, transform_indices = @transform_3, window_bounds = array<i64: 128, 128>}, {pipeline_mode = #tpu.pipeline_mode<synchronous>, transform_indices = @transform_4, window_bounds = array<i64: 1, 128>}, {pipeline_mode = #tpu.pipeline_mode<synchronous>, transform_indices = @transform_5, window_bounds = array<i64: 2, 128>}]} {
    %c0_i32 = arith.constant 0 : i32
    %0 = arith.cmpi eq, %arg0, %c0_i32 : i32
    %1 = arith.extui %0 : i1 to i32
    %c0_i32_0 = arith.constant 0 : i32
    %2 = arith.cmpi ne, %1, %c0_i32_0 : i32
    scf.if %2 {
      %cst_10 = arith.constant 0.000000e+00 : f32
      %12 = vector.broadcast %cst_10 : f32 to vector<2x128xf32>
      %c0_11 = arith.constant 0 : index
      %c0_12 = arith.constant 0 : index
      %13 = vector.load %arg7[%c0_11, %c0_12] : memref<2x128xf32, #tpu.memory_space<vmem>>, vector<2x128xf32>
      tpu.vector_store %arg7[%c0_11, %c0_12], %12 {strides = array<i32>} : memref<2x128xf32, #tpu.memory_space<vmem>>, vector<2x128xf32>,
    } else {
    }
    %c0 = arith.constant 0 : index
    %c0_1 = arith.constant 0 : index
    %3 = vector.load %arg7[%c0, %c0_1] : memref<2x128xf32, #tpu.memory_space<vmem>>, vector<2x128xf32>
    %c0_2 = arith.constant 0 : index
    %c0_3 = arith.constant 0 : index
    %4 = vector.load %arg1[%c0_2, %c0_3] : memref<2x2304xbf16, #tpu.memory_space<vmem>>, vector<2x2304xbf16>
    %c0_4 = arith.constant 0 : index
    %c0_5 = arith.constant 0 : index
    %5 = vector.load %arg2[%c0_4, %c0_5] : memref<2304x128xbf16, #tpu.memory_space<vmem>>, vector<2304x128xbf16>
    %cst = arith.constant dense<0.000000e+00> : vector<2x128xf32>
    %6 = tpu.matmul %4, %5, %cst {dimension_numbers = #tpu.dot_dimension_numbers<[1], [0], [0], [1], [0, 0, 1, 1], [], []>} : vector<2x2304xbf16>, vector<2304x128xbf16>, vector<2x128xf32> -> vector<2x128xf32>
    %7 = arith.addf %3, %6 : vector<2x128xf32>
    %c0_6 = arith.constant 0 : index
    %c0_7 = arith.constant 0 : index
    %8 = vector.load %arg7[%c0_6, %c0_7] : memref<2x128xf32, #tpu.memory_space<vmem>>, vector<2x128xf32>
    tpu.vector_store %arg7[%c0_6, %c0_7], %7 {strides = array<i32>} : memref<2x128xf32, #tpu.memory_space<vmem>>, vector<2x128xf32>,
    %c0_i32_8 = arith.constant 0 : i32
    %9 = arith.cmpi eq, %arg0, %c0_i32_8 : i32
    %10 = arith.extui %9 : i1 to i32
    %c0_i32_9 = arith.constant 0 : i32
    %11 = arith.cmpi ne, %10, %c0_i32_9 : i32
    scf.if %11 {
      %c0_10 = arith.constant 0 : index
      %c0_11 = arith.constant 0 : index
      %12 = vector.load %arg7[%c0_10, %c0_11] : memref<2x128xf32, #tpu.memory_space<vmem>>, vector<2x128xf32>
      %c0_12 = arith.constant 0 : index
      %c0_13 = arith.constant 0 : index
      %13 = vector.load %arg3[%c0_12, %c0_13] : memref<1x128xf32, #tpu.memory_space<vmem>>, vector<1x128xf32>
      %14 = vector.broadcast %13 : vector<1x128xf32> to vector<2x128xf32>
      %15 = arith.addf %12, %14 : vector<2x128xf32>
      %cst_14 = arith.constant 0.000000e+00 : f32
      %16 = vector.broadcast %cst_14 : f32 to vector<2x128xf32>
      %17 = arith.maximumf %15, %16 : vector<2x128xf32>
      %18 = arith.truncf %17 : vector<2x128xf32> to vector<2x128xbf16>
      %c0_15 = arith.constant 0 : index
      %c0_16 = arith.constant 0 : index
      %19 = vector.load %arg4[%c0_15, %c0_16] : memref<128x128xbf16, #tpu.memory_space<vmem>>, vector<128x128xbf16>
      %cst_17 = arith.constant dense<0.000000e+00> : vector<2x128xf32>
      %20 = tpu.matmul %18, %19, %cst_17 {dimension_numbers = #tpu.dot_dimension_numbers<[1], [0], [0], [1], [0, 0, 1, 1], [], []>} : vector<2x128xbf16>, vector<128x128xbf16>, vector<2x128xf32> -> vector<2x128xf32>
      %c0_18 = arith.constant 0 : index
      %c0_19 = arith.constant 0 : index
      %21 = vector.load %arg5[%c0_18, %c0_19] : memref<1x128xf32, #tpu.memory_space<vmem>>, vector<1x128xf32>
      %22 = vector.broadcast %21 : vector<1x128xf32> to vector<2x128xf32>
      %23 = arith.addf %20, %22 : vector<2x128xf32>
      %c0_20 = arith.constant 0 : index
      %c0_21 = arith.constant 0 : index
      %24 = vector.load %arg6[%c0_20, %c0_21] : memref<2x128xf32, #tpu.memory_space<vmem>>, vector<2x128xf32>
      tpu.vector_store %arg6[%c0_20, %c0_21], %23 {strides = array<i32>} : memref<2x128xf32, #tpu.memory_space<vmem>>, vector<2x128xf32>,
    } else {
    }
    return
  }
  func.func @transform_0(%arg0: i32) -> (i32, i32) {
    %c0_i32 = arith.constant 0 : i32
    %c0_i32_0 = arith.constant 0 : i32
    return %c0_i32, %arg0 : i32, i32
  }
  func.func @transform_1(%arg0: i32) -> (i32, i32) {
    %c0_i32 = arith.constant 0 : i32
    %c0_i32_0 = arith.constant 0 : i32
    return %arg0, %c0_i32 : i32, i32
  }
  func.func @transform_2(%arg0: i32) -> (i32, i32) {
    %c0_i32 = arith.constant 0 : i32
    %c0_i32_0 = arith.constant 0 : i32
    %c0_i32_1 = arith.constant 0 : i32
    return %c0_i32, %c0_i32_0 : i32, i32
  }
  func.func @transform_3(%arg0: i32) -> (i32, i32) {
    %c0_i32 = arith.constant 0 : i32
    %c0_i32_0 = arith.constant 0 : i32
    %c0_i32_1 = arith.constant 0 : i32
    return %c0_i32, %c0_i32_0 : i32, i32
  }
  func.func @transform_4(%arg0: i32) -> (i32, i32) {
    %c0_i32 = arith.constant 0 : i32
    %c0_i32_0 = arith.constant 0 : i32
    %c0_i32_1 = arith.constant 0 : i32
    return %c0_i32, %c0_i32_0 : i32, i32
  }
  func.func @transform_5(%arg0: i32) -> (i32, i32) {
    %c0_i32 = arith.constant 0 : i32
    %c0_i32_0 = arith.constant 0 : i32
    %c0_i32_1 = arith.constant 0 : i32
    return %c0_i32, %c0_i32_0 : i32, i32
  }
}

</mosaic_0001>

<llo_original>
// kernel: phase_net_forward.2
$region0: #{phase_net_forward.2}
  #allocation0 [shape = 'u32[]', space=smem, size = 0x4, offset = 0x4, fixed_abs, tag = 'smem constant byte address 0x4 - core index']
  #allocation1 [shape = 'u32[72,128]{1,0:T(1,128)}', space=vmem, size = 0x9000, scoped, tag = 'internal scratch']
  %s0 = inlined_call_operand.vmem [shape: bf16[2,4,36], index: 0, kind: input, shape index: {}]
  %s1 = inlined_call_operand.vmem [shape: bf16[64,4], index: 1, kind: input, shape index: {}]
  %s2 = inlined_call_operand.vmem [shape: f32[64,1], index: 2, kind: input, shape index: {}]
  %s3 = inlined_call_operand.vmem [shape: bf16[64,64], index: 3, kind: input, shape index: {}]
  %s4 = inlined_call_operand.vmem [shape: f32[64,1], index: 4, kind: input, shape index: {}]
  %s5 = inlined_call_operand.vmem [shape: bf16[2,64,36], index: 5, kind: output, shape index: {}]
  %s6 = sld [smem:[#allocation0]]
  $region53: #{phase_net_forward.2} parent=0
    _
  %s8 = ssub.s32 1, %s6
  %s9 = scalar_select 0, %s8, %s6
  loop: start=0, step=1, limit=4
  $region2: #{phase_net_forward.2} parent=0 // loop_pre_header
    _
  $region3: #{phase_net_forward.2} parent=0 // loop_header
    %s11 = sphi 0, %s15
    %p12 = scmp.ge.s32.totalorder %s11, 4
    %s18 = sphi 0, %s30
    %s19 = sphi 0, %s26
    %s20 = sphi 0, %s18
    %s21 = sphi 0, %s19
    %s22 = sphi 0, %s20
    %s23 = sphi 0, %s21
    %s35 = sphi 0, %s37
    %s38 = sphi 0, %s35
    %s39 = sphi 0, %s38
    %s55 = sphi 0, %s39
    %s59 = sphi 0, %s59
    %s61 = sphi 0, %s59
    %s62 = sphi 0, %s61
    %s76 = sphi 0, %s62
    %s80 = sphi 0, %s80
    %s82 = sphi 0, %s80
    %s83 = sphi 0, %s82
    %s97 = sphi 0, %s83
    %s101 = sphi 0, %s101
    %s103 = sphi 0, %s101
    %s104 = sphi 0, %s103
    %s118 = sphi 0, %s104
    %s122 = sphi 0, %s122
    %s124 = sphi 0, %s122
    %s125 = sphi 0, %s124
    %s139 = sphi 0, %s125
    %s147 = sphi 0, %s149
    %s150 = sphi 0, %s147
    %s151 = sphi 0, %s150
    %s167 = sphi 0, %s151
  $region4: #{phase_net_forward.2} parent=0 // loop_header_branch
    %14 = sbr.rel (%p12) target = $region8
  $region5: #{phase_net_forward.2} parent=0 // loop_body
    %s16 = ssub.s32 %s11, 1
    %s17 = ssub.s32 %s11, 2
    %s24 = sadd.s32 1, %s19
    %p25 = scmp.ge.s32.totalorder %s24, 1
    %s26 = scalar_select %p25, 0, %s24
    %s27 = sadd.s32 1, %s18
    %s28 = scalar_select %p25, %s27, %s18
    %p29 = scmp.ge.s32.totalorder %s28, 2
    %s30 = scalar_select %p29, 0, %s28
    %s31 = ssub.s32 %s18, %s30
    %s32 = ssub.s32 %s19, %s26
    %s33 = sor.u32 %s31, %s32
    %p34 = scmp.eq.s32.totalorder %s33, 0
    %s36 = sadd.s32 %s35, 1
    %s37 = scalar_select %p34, %s35, %s36
    %p40 = pneg %p34
    %p41 = scmp.eq.s32.totalorder %s11, 1
    %p42 = por %p40, %p41
    %p43 = scmp.ne.s32.totalorder %s35, %s38
    %p44 = scmp.eq.s32.totalorder %s11, 0
    %p45 = por %p43, %p44
    %p46 = scmp.ne.s32.totalorder %s35, %s38
    %p47 = scmp.eq.s32.totalorder %s16, 1
    %p48 = por %p46, %p47
    %p49 = scmp.ne.s32.totalorder %s38, %s39
    %p50 = scmp.eq.s32.totalorder %s16, 0
    %p51 = por %p49, %p50
    %p52 = scmp.ne.s32.totalorder %s38, %s39
    %p53 = scmp.eq.s32.totalorder %s17, 1
    %p54 = por %p52, %p53
    %p56 = scmp.ne.s32.totalorder %s39, %s55
    %p57 = scmp.eq.s32.totalorder %s17, 0
    %p58 = por %p56, %p57
    %s60 = sadd.s32 %s59, 1
    %p63 = scmp.eq.s32.totalorder %s11, 1
    %p64 = scmp.ne.s32.totalorder %s59, %s61
    %p65 = scmp.eq.s32.totalorder %s11, 0
    %p66 = por %p64, %p65
    %p67 = scmp.ne.s32.totalorder %s59, %s61
    %p68 = scmp.eq.s32.totalorder %s16, 1
    %p69 = por %p67, %p68
    %p70 = scmp.ne.s32.totalorder %s61, %s62
    %p71 = scmp.eq.s32.totalorder %s16, 0
    %p72 = por %p70, %p71
    %p73 = scmp.ne.s32.totalorder %s61, %s62
    %p74 = scmp.eq.s32.totalorder %s17, 1
    %p75 = por %p73, %p74
    %p77 = scmp.ne.s32.totalorder %s62, %s76
    %p78 = scmp.eq.s32.totalorder %s17, 0
    %p79 = por %p77, %p78
    %s81 = sadd.s32 %s80, 1
    %p84 = scmp.eq.s32.totalorder %s11, 1
    %p85 = scmp.ne.s32.totalorder %s80, %s82
    %p86 = scmp.eq.s32.totalorder %s11, 0
    %p87 = por %p85, %p86
    %p88 = scmp.ne.s32.totalorder %s80, %s82
    %p89 = scmp.eq.s32.totalorder %s16, 1
    %p90 = por %p88, %p89
    %p91 = scmp.ne.s32.totalorder %s82, %s83
    %p92 = scmp.eq.s32.totalorder %s16, 0
    %p93 = por %p91, %p92
    %p94 = scmp.ne.s32.totalorder %s82, %s83
    %p95 = scmp.eq.s32.totalorder %s17, 1
    %p96 = por %p94, %p95
    %p98 = scmp.ne.s32.totalorder %s83, %s97
    %p99 = scmp.eq.s32.totalorder %s17, 0
    %p100 = por %p98, %p99
    %s102 = sadd.s32 %s101, 1
    %p105 = scmp.eq.s32.totalorder %s11, 1
    %p106 = scmp.ne.s32.totalorder %s101, %s103
    %p107 = scmp.eq.s32.totalorder %s11, 0
    %p108 = por %p106, %p107
    %p109 = scmp.ne.s32.totalorder %s101, %s103
    %p110 = scmp.eq.s32.totalorder %s16, 1
    %p111 = por %p109, %p110
    %p112 = scmp.ne.s32.totalorder %s103, %s104
    %p113 = scmp.eq.s32.totalorder %s16, 0
    %p114 = por %p112, %p113
    %p115 = scmp.ne.s32.totalorder %s103, %s104
    %p116 = scmp.eq.s32.totalorder %s17, 1
    %p117 = por %p115, %p116
    %p119 = scmp.ne.s32.totalorder %s104, %s118
    %p120 = scmp.eq.s32.totalorder %s17, 0
    %p121 = por %p119, %p120
    %s123 = sadd.s32 %s122, 1
    %p126 = scmp.eq.s32.totalorder %s11, 1
    %p127 = scmp.ne.s32.totalorder %s122, %s124
    %p128 = scmp.eq.s32.totalorder %s11, 0
    %p129 = por %p127, %p128
    %p130 = scmp.ne.s32.totalorder %s122, %s124
    %p131 = scmp.eq.s32.totalorder %s16, 1
    %p132 = por %p130, %p131
    %p133 = scmp.ne.s32.totalorder %s124, %s125
    %p134 = scmp.eq.s32.totalorder %s16, 0
    %p135 = por %p133, %p134
    %p136 = scmp.ne.s32.totalorder %s124, %s125
    %p137 = scmp.eq.s32.totalorder %s17, 1
    %p138 = por %p136, %p137
    %p140 = scmp.ne.s32.totalorder %s125, %s139
    %p141 = scmp.eq.s32.totalorder %s17, 0
    %p142 = por %p140, %p141
    %s143 = ssub.s32 %s18, %s30
    %s144 = ssub.s32 %s19, %s26
    %s145 = sor.u32 %s143, %s144
    %p146 = scmp.eq.s32.totalorder %s145, 0
    %s148 = sadd.s32 %s147, 1
    %s149 = scalar_select %p146, %s147, %s148
    %p152 = pneg %p146
    %p153 = scmp.eq.s32.totalorder %s11, 1
    %p154 = por %p152, %p153
    %p155 = scmp.ne.s32.totalorder %s147, %s150
    %p156 = scmp.eq.s32.totalorder %s11, 0
    %p157 = por %p155, %p156
    %p158 = scmp.ne.s32.totalorder %s147, %s150
    %p159 = scmp.eq.s32.totalorder %s16, 1
    %p160 = por %p158, %p159
    %p161 = scmp.ne.s32.totalorder %s150, %s151
    %p162 = scmp.eq.s32.totalorder %s16, 0
    %p163 = por %p161, %p162
    %p164 = scmp.ne.s32.totalorder %s150, %s151
    %p165 = scmp.eq.s32.totalorder %s17, 1
    %p166 = por %p164, %p165
    %p168 = scmp.ne.s32.totalorder %s151, %s167
    %p169 = scmp.eq.s32.totalorder %s17, 0
    %p170 = por %p168, %p169
    %p171 = scmp.le.s32.totalorder 1, %s11
    %p172 = scmp.lt.s32.totalorder %s11, 3
    %p173 = pnand %p171, %p172
    %p174 = pneg %p173
    // Predicated region
    $region9: #{phase_net_forward.2} parent=5 // pred_check
      _
    $region10: #{phase_net_forward.2} parent=5 // pred_check_branch
      %176 = sbr.rel (%p173) target = $region12
    $region11: #{phase_net_forward.2} parent=5 // pred_region
      %s177 = ssub.s32 %s11, 1
      // Predicated region
      $region13: #{phase_net_forward.2} parent=11 // pred_check
        %p178 = pneg %p72
      $region14: #{phase_net_forward.2} parent=11 // pred_check_branch
        %180 = sbr.rel (%p178) target = $region16
      $region15: #{phase_net_forward.2} parent=11 // pred_region
        _
      $region16: #{phase_net_forward.2} parent=11 // pred_fallthru
        _
      // Predicated region
      $region17: #{phase_net_forward.2} parent=11 // pred_check
        %p181 = pneg %p93
      $region18: #{phase_net_forward.2} parent=11 // pred_check_branch
        %183 = sbr.rel (%p181) target = $region20
      $region19: #{phase_net_forward.2} parent=11 // pred_region
        _
      $region20: #{phase_net_forward.2} parent=11 // pred_fallthru
        _
      // Predicated region
      $region21: #{phase_net_forward.2} parent=11 // pred_check
        %p184 = pneg %p114
      $region22: #{phase_net_forward.2} parent=11 // pred_check_branch
        %186 = sbr.rel (%p184) target = $region24
      $region23: #{phase_net_forward.2} parent=11 // pred_region
        _
      $region24: #{phase_net_forward.2} parent=11 // pred_fallthru
        _
      // Predicated region
      $region25: #{phase_net_forward.2} parent=11 // pred_check
        %p187 = pneg %p135
      $region26: #{phase_net_forward.2} parent=11 // pred_check_branch
        %189 = sbr.rel (%p187) target = $region28
      $region27: #{phase_net_forward.2} parent=11 // pred_region
        _
      $region28: #{phase_net_forward.2} parent=11 // pred_fallthru
        _
    $region12: #{phase_net_forward.2} parent=5 // pred_fallthru
      _
    %p190 = scmp.lt.s32.totalorder %s11, 2
    // Predicated region
    $region29: #{phase_net_forward.2} parent=5 // pred_check
      %p191 = pneg %p190
    $region30: #{phase_net_forward.2} parent=5 // pred_check_branch
      %193 = sbr.rel (%p191) target = $region32
    $region31: #{phase_net_forward.2} parent=5 // pred_region
      // Predicated region
      $region33: #{phase_net_forward.2} parent=31 // pred_check
        %p194 = pneg %p45
      $region34: #{phase_net_forward.2} parent=31 // pred_check_branch
        %196 = sbr.rel (%p194) target = $region36
      $region35: #{phase_net_forward.2} parent=31 // pred_region
        %p197 = scmp.lt.s32.totalorder %s18, 1
        %s198 = scalar_select %p197, %s18, 1
        %p199 = scmp.lt.s32.totalorder %s19, 0
        %s200 = scalar_select %p199, %s19, 0
        %s201 = sadd.s32 %s200, %s198
        %s202 = smul.addr %s201, 2
        %s203 = scalar_lea.vmem %s0, %s202
      $region36: #{phase_net_forward.2} parent=31 // pred_fallthru
        _
    $region32: #{phase_net_forward.2} parent=5 // pred_fallthru
      _
    %p204 = scmp.le.s32.totalorder 1, %s11
    %p205 = scmp.lt.s32.totalorder %s11, 3
    %p206 = pnand %p204, %p205
    %p207 = pneg %p206
    // Predicated region
    $region37: #{phase_net_forward.2} parent=5 // pred_check
      _
    $region38: #{phase_net_forward.2} parent=5 // pred_check_branch
      %209 = sbr.rel (%p206) target = $region40
    $region39: #{phase_net_forward.2} parent=5 // pred_region
      %s210 = ssub.s32 %s11, 1
      %p211 = scmp.lt.s32.totalorder %s20, 1
      %s212 = scalar_select %p211, %s20, 1
      %p213 = scmp.lt.s32.totalorder %s21, 0
      %s214 = scalar_select %p213, %s21, 0
      %s215 = sadd.s32 %s214, %s212
      %s216 = smul.addr %s215, 2
      %s217 = scalar_lea.vmem %s0, %s216
      %p218 = pneg %p51
      %p219 = pneg %p48
      %p220 = pneg %p72
      %p221 = pneg %p69
      %p222 = pneg %p93
      %p223 = pneg %p90
      %p224 = pneg %p114
      %p225 = pneg %p111
      %p226 = pneg %p135
      %p227 = pneg %p132
      %p228 = pneg %p163
      %p229 = pneg %p160
      %p230 = scmp.lt.s32.totalorder %s20, 1
      %s231 = scalar_select %p230, %s20, 1
      %p232 = scmp.lt.s32.totalorder %s21, 0
      %s233 = scalar_select %p232, %s21, 0
      %s234 = smul.addr %s231, 8
      %s235 = sadd.s32 %s233, %s234
      %s236 = smul.addr %s235, 4
      %s237 = scalar_lea.vmem %s5, %s236
      %p238 = scmp.lt.s32.totalorder %s20, 1
      %s239 = scalar_select %p238, %s20, 1
      %p240 = scmp.lt.s32.totalorder %s21, 0
      %s241 = scalar_select %p240, %s21, 0
      %s242 = sadd.s32 %s241, %s239
      %s243 = smul.addr %s242, 2
      %s244 = scalar_lea.vmem %s0, %s243
      %p245 = scmp.lt.s32.totalorder %s20, 1
      %s246 = scalar_select %p245, %s20, 1
      %p247 = scmp.lt.s32.totalorder %s21, 0
      %s248 = scalar_select %p247, %s21, 0
      %s249 = smul.addr %s246, 8
      %s250 = sadd.s32 %s248, %s249
      %s251 = smul.addr %s250, 4
      %s252 = scalar_lea.vmem %s5, %s251
      %v254 = vld [vmem:[%s244] sm:$0x3]
      %v255 = vld [vmem:[%s1] sm:$0xf]
      %v256 = vld [vmem:[%s1 + $0x4] sm:$0xf]
      %v257 = vld [vmem:[%s1 + $0x8] sm:$0xf]
      %v258 = vld [vmem:[%s1 + $0xc] sm:$0xf]
      %v259 = vld [vmem:[%s1 + $0x10] sm:$0xf]
      %v260 = vld [vmem:[%s1 + $0x14] sm:$0xf]
      %v261 = vld [vmem:[%s1 + $0x18] sm:$0xf]
      %v262 = vld [vmem:[%s1 + $0x1c] sm:$0xf]
      %v263 = vld [vmem:[%s2] sm:$0xff]
      %v264 = vld [vmem:[%s2 + $0x8] sm:$0xff]
      %v265 = vld [vmem:[%s2 + $0x10] sm:$0xff]
      %v266 = vld [vmem:[%s2 + $0x18] sm:$0xff]
      %v267 = vld [vmem:[%s2 + $0x20] sm:$0xff]
      %v268 = vld [vmem:[%s2 + $0x28] sm:$0xff]
      %v269 = vld [vmem:[%s2 + $0x30] sm:$0xff]
      %v270 = vld [vmem:[%s2 + $0x38] sm:$0xff]
      %272 = vset.pattern.permute.xlu0 0
      %273 = vperm.xlu0 %272, %v263
      %v274 = vpop.permute.xlu0 %273
      %277 = vset.pattern.permute.xlu0 0
      %278 = vperm.xlu0 %277, %v264
      %v279 = vpop.permute.xlu0 %278
      %282 = vset.pattern.permute.xlu0 0
      %283 = vperm.xlu0 %282, %v265
      %v284 = vpop.permute.xlu0 %283
      %287 = vset.pattern.permute.xlu0 0
      %288 = vperm.xlu0 %287, %v266
      %v289 = vpop.permute.xlu0 %288
      %292 = vset.pattern.permute.xlu0 0
      %293 = vperm.xlu0 %292, %v267
      %v294 = vpop.permute.xlu0 %293
      %297 = vset.pattern.permute.xlu0 0
      %298 = vperm.xlu0 %297, %v268
      %v299 = vpop.permute.xlu0 %298
      %302 = vset.pattern.permute.xlu0 0
      %303 = vperm.xlu0 %302, %v269
      %v304 = vpop.permute.xlu0 %303
      %307 = vset.pattern.permute.xlu0 0
      %308 = vperm.xlu0 %307, %v270
      %v309 = vpop.permute.xlu0 %308
      %v319 = vunpack.c.l.b16 %v255
      %v320 = vunpack.c.l.b16 %v256
      %v321 = vunpack.c.l.b16 %v257
      %v322 = vunpack.c.l.b16 %v258
      %v323 = vunpack.c.l.b16 %v259
      %v324 = vunpack.c.l.b16 %v260
      %v325 = vunpack.c.l.b16 %v261
      %v326 = vunpack.c.l.b16 %v262
      %v327 = vpack.c.b16 %v320, %v319
      %v328 = vpack.c.b16 %v322, %v321
      %v329 = vpack.c.b16 %v324, %v323
      %v330 = vpack.c.b16 %v326, %v325
      %vm331 = vcmask 31744
      %v333 = vsel %vm331, %v327, 0
      %v336 = vsel %vm331, %v328, 0
      %v339 = vsel %vm331, %v329, 0
      %v342 = vsel %vm331, %v330, 0
      %vm344 = vcmask 1041408
      %v346 = vsel %vm344, %v254, 0
      %348 = vmatpush.bf16.msra.mxu0 0
      %349 = vmatpush.bf16.msra.mxu0 0
      %350 = vmatpush.bf16.msra.mxu0 0
      %351 = vmatpush.bf16.msra.mxu0 0
      %352 = vmatpush.bf16.msra.mxu0 0
      %353 = vmatpush.bf16.msra.mxu0 0
      %354 = vmatpush.bf16.msra.mxu0 0
      %355 = vmatpush.bf16.msra.mxu0 %v346
      %356 = vmatmul.bf16.gmra.mxu0 %v333
      %v357 = vpop.f32.mrf.mxu0
      %v358 = vadd.f32 %v274, %v357
      %v359 = vpop.f32.mrf.mxu0
      %v360 = vadd.f32 %v279, %v359
      %361 = vmatmul.bf16.gmra.mxu0 %v336
      %v362 = vpop.f32.mrf.mxu0
      %v363 = vadd.f32 %v284, %v362
      %v364 = vpop.f32.mrf.mxu0
      %v365 = vadd.f32 %v289, %v364
      %366 = vmatmul.bf16.gmra.mxu0 %v339
      %v367 = vpop.f32.mrf.mxu0
      %v368 = vadd.f32 %v294, %v367
      %v369 = vpop.f32.mrf.mxu0
      %v370 = vadd.f32 %v299, %v369
      %371 = vmatmul.bf16.gmra.mxu0 %v342
      %v372 = vpop.f32.mrf.mxu0
      %v373 = vadd.f32 %v304, %v372
      %v374 = vpop.f32.mrf.mxu0
      %v375 = vadd.f32 %v309, %v374
      %376 = vdwg.mxu0
      %v377 = vmax.f32 %v358, 0.0
      %v378 = vmax.f32 %v360, 0.0
      %v379 = vmax.f32 %v363, 0.0
      %v380 = vmax.f32 %v365, 0.0
      %v381 = vmax.f32 %v368, 0.0
      %v382 = vmax.f32 %v370, 0.0
      %v383 = vmax.f32 %v373, 0.0
      %v384 = vmax.f32 %v375, 0.0
      %v385 = vld [vmem:[%s3] sm:$0xf]
      %v386 = vld [vmem:[%s3 + $0x4] sm:$0xf]
      %v387 = vld [vmem:[%s3 + $0x8] sm:$0xf]
      %v388 = vld [vmem:[%s3 + $0xc] sm:$0xf]
      %v389 = vld [vmem:[%s3 + $0x10] sm:$0xf]
      %v390 = vld [vmem:[%s3 + $0x14] sm:$0xf]
      %v391 = vld [vmem:[%s3 + $0x18] sm:$0xf]
      %v392 = vld [vmem:[%s3 + $0x1c] sm:$0xf]
      %v393 = vpack.c.bf16 %v378, %v377
      %v394 = vpack.c.bf16 %v380, %v379
      %v395 = vpack.c.bf16 %v382, %v381
      %v396 = vpack.c.bf16 %v384, %v383
      %v397 = vld [vmem:[%s4] sm:$0xff]
      %v398 = vld [vmem:[%s4 + $0x8] sm:$0xff]
      %v399 = vld [vmem:[%s4 + $0x10] sm:$0xff]
      %v400 = vld [vmem:[%s4 + $0x18] sm:$0xff]
      %v401 = vld [vmem:[%s4 + $0x20] sm:$0xff]
      %v402 = vld [vmem:[%s4 + $0x28] sm:$0xff]
      %v403 = vld [vmem:[%s4 + $0x30] sm:$0xff]
      %v404 = vld [vmem:[%s4 + $0x38] sm:$0xff]
      %406 = vset.pattern.permute.xlu0 0
      %407 = vperm.xlu0 %406, %v397
      %v408 = vpop.permute.xlu0 %407
      %411 = vset.pattern.permute.xlu0 0
      %412 = vperm.xlu0 %411, %v398
      %v413 = vpop.permute.xlu0 %412
      %416 = vset.pattern.permute.xlu0 0
      %417 = vperm.xlu0 %416, %v399
      %v418 = vpop.permute.xlu0 %417
      %421 = vset.pattern.permute.xlu0 0
      %422 = vperm.xlu0 %421, %v400
      %v423 = vpop.permute.xlu0 %422
      %426 = vset.pattern.permute.xlu0 0
      %427 = vperm.xlu0 %426, %v401
      %v428 = vpop.permute.xlu0 %427
      %431 = vset.pattern.permute.xlu0 0
      %432 = vperm.xlu0 %431, %v402
      %v433 = vpop.permute.xlu0 %432
      %436 = vset.pattern.permute.xlu0 0
      %437 = vperm.xlu0 %436, %v403
      %v438 = vpop.permute.xlu0 %437
      %441 = vset.pattern.permute.xlu0 0
      %442 = vperm.xlu0 %441, %v404
      %v443 = vpop.permute.xlu0 %442
      %v453 = vunpack.c.l.b16 %v385
      %v454 = vunpack.c.l.b16 %v386
      %v455 = vunpack.c.l.b16 %v387
      %v456 = vunpack.c.l.b16 %v388
      %v457 = vunpack.c.l.b16 %v389
      %v458 = vunpack.c.l.b16 %v390
      %v459 = vunpack.c.l.b16 %v391
      %v460 = vunpack.c.l.b16 %v392
      %v461 = vpack.c.b16 %v454, %v453
      %v462 = vpack.c.b16 %v456, %v455
      %v463 = vpack.c.b16 %v458, %v457
      %v464 = vpack.c.b16 %v460, %v459
      %vm465 = vcmask 523264
      %v467 = vsel %vm465, %v461, 0
      %v470 = vsel %vm465, %v462, 0
      %v473 = vsel %vm465, %v463, 0
      %v476 = vsel %vm465, %v464, 0
      %478 = vmatpush.bf16.msra.mxu0 0
      %479 = vmatpush.bf16.msra.mxu0 0
      %480 = vmatpush.bf16.msra.mxu0 0
      %481 = vmatpush.bf16.msra.mxu0 0
      %482 = vmatpush.bf16.msra.mxu0 %v396
      %483 = vmatpush.bf16.msra.mxu0 %v395
      %484 = vmatpush.bf16.msra.mxu0 %v394
      %485 = vmatpush.bf16.msra.mxu0 %v393
      %486 = vmatmul.bf16.gmra.mxu0 %v467
      %v487 = vpop.f32.mrf.mxu0
      %v488 = vadd.f32 %v408, %v487
      %v489 = vpop.f32.mrf.mxu0
      %v490 = vadd.f32 %v413, %v489
      %491 = vmatmul.bf16.gmra.mxu0 %v470
      %v492 = vpop.f32.mrf.mxu0
      %v493 = vadd.f32 %v418, %v492
      %v494 = vpop.f32.mrf.mxu0
      %v495 = vadd.f32 %v423, %v494
      %496 = vmatmul.bf16.gmra.mxu0 %v473
      %v497 = vpop.f32.mrf.mxu0
      %v498 = vadd.f32 %v428, %v497
      %v499 = vpop.f32.mrf.mxu0
      %v500 = vadd.f32 %v433, %v499
      %501 = vmatmul.bf16.gmra.mxu0 %v476
      %v502 = vpop.f32.mrf.mxu0
      %v503 = vadd.f32 %v438, %v502
      %v504 = vpop.f32.mrf.mxu0
      %v505 = vadd.f32 %v443, %v504
      %506 = vdwg.mxu0
      %v507 = vmax.f32 %v488, 0.0
      %v508 = vmax.f32 %v490, 0.0
      %v509 = vmax.f32 %v493, 0.0
      %v510 = vmax.f32 %v495, 0.0
      %v511 = vmax.f32 %v498, 0.0
      %v512 = vmax.f32 %v500, 0.0
      %v513 = vmax.f32 %v503, 0.0
      %v514 = vmax.f32 %v505, 0.0
      %v515 = vpack.c.bf16 %v507, %v507
      %v516 = vpack.c.bf16 %v508, %v508
      %v517 = vpack.c.bf16 %v509, %v509
      %v518 = vpack.c.bf16 %v510, %v510
      %v519 = vpack.c.bf16 %v511, %v511
      %v520 = vpack.c.bf16 %v512, %v512
      %v521 = vpack.c.bf16 %v513, %v513
      %v522 = vpack.c.bf16 %v514, %v514
      %vm523 = vcmask 289792
      %524 = vst.msk [vmem:[%s252] sm:$0xf] %vm523, %v515
      %525 = vst.msk [vmem:[%s252 + $0x4] sm:$0xf] %vm523, %v516
      %526 = vst.msk [vmem:[%s252 + $0x8] sm:$0xf] %vm523, %v517
      %527 = vst.msk [vmem:[%s252 + $0xc] sm:$0xf] %vm523, %v518
      %528 = vst.msk [vmem:[%s252 + $0x10] sm:$0xf] %vm523, %v519
      %529 = vst.msk [vmem:[%s252 + $0x14] sm:$0xf] %vm523, %v520
      %530 = vst.msk [vmem:[%s252 + $0x18] sm:$0xf] %vm523, %v521
      %531 = vst.msk [vmem:[%s252 + $0x1c] sm:$0xf] %vm523, %v522
      %p532 = scmp.lt.s32.totalorder %s20, 1
      %s533 = scalar_select %p532, %s20, 1
      %p534 = scmp.lt.s32.totalorder %s21, 0
      %s535 = scalar_select %p534, %s21, 0
      %s536 = smul.addr %s533, 8
      %s537 = sadd.s32 %s535, %s536
      %s538 = smul.addr %s537, 4
      %s539 = scalar_lea.vmem %s5, %s538
      // Predicated region
      $region41: #{phase_net_forward.2} parent=39 // pred_check
        %p540 = pneg %p160
      $region42: #{phase_net_forward.2} parent=39 // pred_check_branch
        %542 = sbr.rel (%p540) target = $region44
      $region43: #{phase_net_forward.2} parent=39 // pred_region
        _
      $region44: #{phase_net_forward.2} parent=39 // pred_fallthru
        _
    $region40: #{phase_net_forward.2} parent=5 // pred_fallthru
      _
    %p543 = scmp.le.s32.totalorder 2, %s11
    // Predicated region
    $region45: #{phase_net_forward.2} parent=5 // pred_check
      %p544 = pneg %p543
    $region46: #{phase_net_forward.2} parent=5 // pred_check_branch
      %546 = sbr.rel (%p544) target = $region48
    $region47: #{phase_net_forward.2} parent=5 // pred_region
      %s547 = ssub.s32 %s11, 2
      // Predicated region
      $region49: #{phase_net_forward.2} parent=47 // pred_check
        %p548 = pneg %p166
      $region50: #{phase_net_forward.2} parent=47 // pred_check_branch
        %550 = sbr.rel (%p548) target = $region52
      $region51: #{phase_net_forward.2} parent=47 // pred_region
        %p551 = scmp.lt.s32.totalorder %s22, 1
        %s552 = scalar_select %p551, %s22, 1
        %p553 = scmp.lt.s32.totalorder %s23, 0
        %s554 = scalar_select %p553, %s23, 0
        %s555 = smul.addr %s552, 8
        %s556 = sadd.s32 %s554, %s555
        %s557 = smul.addr %s556, 4
        %s558 = scalar_lea.vmem %s5, %s557
      $region52: #{phase_net_forward.2} parent=47 // pred_fallthru
        _
    $region48: #{phase_net_forward.2} parent=5 // pred_fallthru
      _
  $region6: #{phase_net_forward.2} parent=0 // loop_footer
    %s15 = sadd.s32 1, %s11
  $region7: #{phase_net_forward.2} parent=0 // loop_footer_branch
    %10 = sbr.rel target = $region3
  $region8: #{phase_net_forward.2} parent=0 // loop_exit
    _

// kernel: phase_net_forward.3
$region0: #{phase_net_forward.3}
  #allocation0 [shape = 'u32[]', space=smem, size = 0x4, offset = 0x4, fixed_abs, tag = 'smem constant byte address 0x4 - core index']
  #allocation1 [shape = 'u32[72,128]{1,0:T(1,128)}', space=vmem, size = 0x9000, scoped, tag = 'internal scratch']
  #allocation2 [shape = 'f32[2,128]{1,0:T(2,128)}', space=vmem, size = 0x400, scoped, tag = 'scratch operand']
  %s0 = inlined_call_operand.vmem [shape: bf16[2,2304], index: 0, kind: input, shape index: {}]
  %s1 = inlined_call_operand.hbm [shape: bf16[2304,128], index: 1, kind: input, shape index: {}]
  %s2 = inlined_call_operand.vmem [shape: f32[1,128], index: 2, kind: input, shape index: {}]
  %s3 = inlined_call_operand.vmem [shape: bf16[128,128], index: 3, kind: input, shape index: {}]
  %s4 = inlined_call_operand.vmem [shape: f32[1,128], index: 4, kind: input, shape index: {}]
  %s5 = inlined_call_operand.hbm [shape: f32[2,128], index: 5, kind: output, shape index: {}]
  %s6 = sld [smem:[#allocation0]]
  $region42: #{phase_net_forward.3} parent=0
    _
  %s8 = ssub.s32 1, %s6
  %s9 = scalar_select 0, %s8, %s6
  $region1: #{phase_net_forward.3} parent=0
    #allocation3 [shape = 'u8[589824]{0}', space=vmem, size = 0x90000, scoped, tag = 'input window, operand 1, single buffered']
    #allocation4 [shape = 's32[1]{0}', space=sflag, size = 0x4, scoped, tag = 'scoped memory for phase_net_forward.3']
    #allocation5 [shape = 's32[1]{0}', space=sflag, size = 0x4, scoped, tag = 'scoped memory for phase_net_forward.3']
    #allocation6 [shape = 'u8[1024]{0}', space=vmem, size = 0x400, scoped, tag = 'output window, operand 0, single buffered']
    %10 = vsyncpa [#allocation4], 0
    %11 = vsyncpa [#allocation5], 0
    // Predicated region
    $region2: #{phase_net_forward.3} parent=1 // pred_check
      _
    $region3: #{phase_net_forward.3} parent=1 // pred_check_branch
      %13 = sbr.rel (0) target = $region5
    $region4: #{phase_net_forward.3} parent=1 // pred_region
      _
    $region5: #{phase_net_forward.3} parent=1 // pred_fallthru
      _
    // Predicated region
    $region6: #{phase_net_forward.3} parent=1 // pred_check
      _
    $region7: #{phase_net_forward.3} parent=1 // pred_check_branch
      %15 = sbr.rel (0) target = $region9
    $region8: #{phase_net_forward.3} parent=1 // pred_region
      %17 = vsyncadd [#allocation4], 0
      %s18 = sshll.u32 %s1, 4
      %s19 = int_to_ptr.hbm [resolvable:$true] %s18
      %s20 = sshll.u32 [#allocation3], 4
      %s21 = int_to_ptr.vmem [resolvable:$true] %s20
      %26 = dma.hbm_to_vmem [thread:$0]  %s19, 18432, %s21, [#allocation4], 64, 64, 4
    $region9: #{phase_net_forward.3} parent=1 // pred_fallthru
      _
    // Predicated region
    $region10: #{phase_net_forward.3} parent=1 // pred_check
      _
    $region11: #{phase_net_forward.3} parent=1 // pred_check_branch
      %28 = sbr.rel (0) target = $region13
    $region12: #{phase_net_forward.3} parent=1 // pred_region
      _
    $region13: #{phase_net_forward.3} parent=1 // pred_fallthru
      _
    // Predicated region
    $region14: #{phase_net_forward.3} parent=1 // pred_check
      _
    $region15: #{phase_net_forward.3} parent=1 // pred_check_branch
      %30 = sbr.rel (0) target = $region17
    $region16: #{phase_net_forward.3} parent=1 // pred_region
      _
    $region17: #{phase_net_forward.3} parent=1 // pred_fallthru
      _
    // Predicated region
    $region18: #{phase_net_forward.3} parent=1 // pred_check
      _
    $region19: #{phase_net_forward.3} parent=1 // pred_check_branch
      %32 = sbr.rel (0) target = $region21
    $region20: #{phase_net_forward.3} parent=1 // pred_region
      _
    $region21: #{phase_net_forward.3} parent=1 // pred_fallthru
      _
    // Predicated region
    $region22: #{phase_net_forward.3} parent=1 // pred_check
      _
    $region23: #{phase_net_forward.3} parent=1 // pred_check_branch
      %34 = sbr.rel (0) target = $region25
    $region24: #{phase_net_forward.3} parent=1 // pred_region
      %36 = dma.done [#allocation4], 18432
    $region25: #{phase_net_forward.3} parent=1 // pred_fallthru
      _
    %p37 = scmp.eq.s32.totalorder 0, 0
    // Predicated region
    $region26: #{phase_net_forward.3} parent=1 // pred_check
      %p38 = pneg %p37
    $region27: #{phase_net_forward.3} parent=1 // pred_check_branch
      %40 = sbr.rel (%p38) target = $region29
    $region28: #{phase_net_forward.3} parent=1 // pred_region
      %41 = vst [vmem:[#allocation2] sm:$0x3] 0.0
    $region29: #{phase_net_forward.3} parent=1 // pred_fallthru
      _
    %v42 = vld [vmem:[#allocation2] sm:$0x3]
    %v43 = vld [vmem:[%s0] sm:$0xff]
    %v44 = vld [vmem:[%s0 + $0x8] sm:$0xff]
    %v45 = vld [vmem:[%s0 + $0x10] sm:$0x3]
    %v46 = vld [vmem:[#allocation3] sm:$0xf]
    %v47 = vld [vmem:[#allocation3 + $0x4] sm:$0xf]
    %v48 = vld [vmem:[#allocation3 + $0x8] sm:$0xf]
    %v49 = vld [vmem:[#allocation3 + $0xc] sm:$0xf]
    %v50 = vld [vmem:[#allocation3 + $0x10] sm:$0xf]
    %v51 = vld [vmem:[#allocation3 + $0x14] sm:$0xf]
    %v52 = vld [vmem:[#allocation3 + $0x18] sm:$0xf]
    %v53 = vld [vmem:[#allocation3 + $0x1c] sm:$0xf]
    %v54 = vld [vmem:[#allocation3 + $0x20] sm:$0xf]
    %v55 = vld [vmem:[#allocation3 + $0x24] sm:$0xf]
    %v56 = vld [vmem:[#allocation3 + $0x28] sm:$0xf]
    %v57 = vld [vmem:[#allocation3 + $0x2c] sm:$0xf]
    %v58 = vld [vmem:[#allocation3 + $0x30] sm:$0xf]
    %v59 = vld [vmem:[#allocation3 + $0x34] sm:$0xf]
    %v60 = vld [vmem:[#allocation3 + $0x38] sm:$0xf]
    %v61 = vld [vmem:[#allocation3 + $0x3c] sm:$0xf]
    %v62 = vld [vmem:[#allocation3 + $0x40] sm:$0xf]
    %v63 = vld [vmem:[#allocation3 + $0x44] sm:$0xf]
    %v64 = vld [vmem:[#allocation3 + $0x48] sm:$0xf]
    %v65 = vld [vmem:[#allocation3 + $0x4c] sm:$0xf]
    %v66 = vld [vmem:[#allocation3 + $0x50] sm:$0xf]
    %v67 = vld [vmem:[#allocation3 + $0x54] sm:$0xf]
    %v68 = vld [vmem:[#allocation3 + $0x58] sm:$0xf]
    %v69 = vld [vmem:[#allocation3 + $0x5c] sm:$0xf]
    %v70 = vld [vmem:[#allocation3 + $0x60] sm:$0xf]
    %v71 = vld [vmem:[#allocation3 + $0x64] sm:$0xf]
    %v72 = vld [vmem:[#allocation3 + $0x68] sm:$0xf]
    %v73 = vld [vmem:[#allocation3 + $0x6c] sm:$0xf]
    %v74 = vld [vmem:[#allocation3 + $0x70] sm:$0xf]
    %v75 = vld [vmem:[#allocation3 + $0x74] sm:$0xf]
    %v76 = vld [vmem:[#allocation3 + $0x78] sm:$0xf]
    %v77 = vld [vmem:[#allocation3 + $0x7c] sm:$0xf]
    %v78 = vld [vmem:[#allocation3 + $0x80] sm:$0xf]
    %v79 = vld [vmem:[#allocation3 + $0x84] sm:$0xf]
    %v80 = vld [vmem:[#allocation3 + $0x88] sm:$0xf]
    %v81 = vld [vmem:[#allocation3 + $0x8c] sm:$0xf]
    %v82 = vld [vmem:[#allocation3 + $0x90] sm:$0xf]
    %v83 = vld [vmem:[#allocation3 + $0x94] sm:$0xf]
    %v84 = vld [vmem:[#allocation3 + $0x98] sm:$0xf]
    %v85 = vld [vmem:[#allocation3 + $0x9c] sm:$0xf]
    %v86 = vld [vmem:[#allocation3 + $0xa0] sm:$0xf]
    %v87 = vld [vmem:[#allocation3 + $0xa4] sm:$0xf]
    %v88 = vld [vmem:[#allocation3 + $0xa8] sm:$0xf]
    %v89 = vld [vmem:[#allocation3 + $0xac] sm:$0xf]
    %v90 = vld [vmem:[#allocation3 + $0xb0] sm:$0xf]
    %v91 = vld [vmem:[#allocation3 + $0xb4] sm:$0xf]
    %v92 = vld [vmem:[#allocation3 + $0xb8] sm:$0xf]
    %v93 = vld [vmem:[#allocation3 + $0xbc] sm:$0xf]
    %v94 = vld [vmem:[#allocation3 + $0xc0] sm:$0xf]
    %v95 = vld [vmem:[#allocation3 + $0xc4] sm:$0xf]
    %v96 = vld [vmem:[#allocation3 + $0xc8] sm:$0xf]
    %v97 = vld [vmem:[#allocation3 + $0xcc] sm:$0xf]
    %v98 = vld [vmem:[#allocation3 + $0xd0] sm:$0xf]
    %v99 = vld [vmem:[#allocation3 + $0xd4] sm:$0xf]
    %v100 = vld [vmem:[#allocation3 + $0xd8] sm:$0xf]
    %v101 = vld [vmem:[#allocation3 + $0xdc] sm:$0xf]
    %v102 = vld [vmem:[#allocation3 + $0xe0] sm:$0xf]
    %v103 = vld [vmem:[#allocation3 + $0xe4] sm:$0xf]
    %v104 = vld [vmem:[#allocation3 + $0xe8] sm:$0xf]
    %v105 = vld [vmem:[#allocation3 + $0xec] sm:$0xf]
    %v106 = vld [vmem:[#allocation3 + $0xf0] sm:$0xf]
    %v107 = vld [vmem:[#allocation3 + $0xf4] sm:$0xf]
    %v108 = vld [vmem:[#allocation3 + $0xf8] sm:$0xf]
    %v109 = vld [vmem:[#allocation3 + $0xfc] sm:$0xf]
    %v110 = vld [vmem:[#allocation3 + $0x100] sm:$0xf]
    %v111 = vld [vmem:[#allocation3 + $0x104] sm:$0xf]
    %v112 = vld [vmem:[#allocation3 + $0x108] sm:$0xf]
    %v113 = vld [vmem:[#allocation3 + $0x10c] sm:$0xf]
    %v114 = vld [vmem:[#allocation3 + $0x110] sm:$0xf]
    %v115 = vld [vmem:[#allocation3 + $0x114] sm:$0xf]
    %v116 = vld [vmem:[#allocation3 + $0x118] sm:$0xf]
    %v117 = vld [vmem:[#allocation3 + $0x11c] sm:$0xf]
    %v118 = vld [vmem:[#allocation3 + $0x120] sm:$0xf]
    %v119 = vld [vmem:[#allocation3 + $0x124] sm:$0xf]
    %v120 = vld [vmem:[#allocation3 + $0x128] sm:$0xf]
    %v121 = vld [vmem:[#allocation3 + $0x12c] sm:$0xf]
    %v122 = vld [vmem:[#allocation3 + $0x130] sm:$0xf]
    %v123 = vld [vmem:[#allocation3 + $0x134] sm:$0xf]
    %v124 = vld [vmem:[#allocation3 + $0x138] sm:$0xf]
    %v125 = vld [vmem:[#allocation3 + $0x13c] sm:$0xf]
    %v126 = vld [vmem:[#allocation3 + $0x140] sm:$0xf]
    %v127 = vld [vmem:[#allocation3 + $0x144] sm:$0xf]
    %v128 = vld [vmem:[#allocation3 + $0x148] sm:$0xf]
    %v129 = vld [vmem:[#allocation3 + $0x14c] sm:$0xf]
    %v130 = vld [vmem:[#allocation3 + $0x150] sm:$0xf]
    %v131 = vld [vmem:[#allocation3 + $0x154] sm:$0xf]
    %v132 = vld [vmem:[#allocation3 + $0x158] sm:$0xf]
    %v133 = vld [vmem:[#allocation3 + $0x15c] sm:$0xf]
    %v134 = vld [vmem:[#allocation3 + $0x160] sm:$0xf]
    %v135 = vld [vmem:[#allocation3 + $0x164] sm:$0xf]
    %v136 = vld [vmem:[#allocation3 + $0x168] sm:$0xf]
    %v137 = vld [vmem:[#allocation3 + $0x16c] sm:$0xf]
    %v138 = vld [vmem:[#allocation3 + $0x170] sm:$0xf]
    %v139 = vld [vmem:[#allocation3 + $0x174] sm:$0xf]
    %v140 = vld [vmem:[#allocation3 + $0x178] sm:$0xf]
    %v141 = vld [vmem:[#allocation3 + $0x17c] sm:$0xf]
    %v142 = vld [vmem:[#allocation3 + $0x180] sm:$0xf]
    %v143 = vld [vmem:[#allocation3 + $0x184] sm:$0xf]
    %v144 = vld [vmem:[#allocation3 + $0x188] sm:$0xf]
    %v145 = vld [vmem:[#allocation3 + $0x18c] sm:$0xf]
    %v146 = vld [vmem:[#allocation3 + $0x190] sm:$0xf]
    %v147 = vld [vmem:[#allocation3 + $0x194] sm:$0xf]
    %v148 = vld [vmem:[#allocation3 + $0x198] sm:$0xf]
    %v149 = vld [vmem:[#allocation3 + $0x19c] sm:$0xf]
    %v150 = vld [vmem:[#allocation3 + $0x1a0] sm:$0xf]
    %v151 = vld [vmem:[#allocation3 + $0x1a4] sm:$0xf]
    %v152 = vld [vmem:[#allocation3 + $0x1a8] sm:$0xf]
    %v153 = vld [vmem:[#allocation3 + $0x1ac] sm:$0xf]
    %v154 = vld [vmem:[#allocation3 + $0x1b0] sm:$0xf]
    %v155 = vld [vmem:[#allocation3 + $0x1b4] sm:$0xf]
    %v156 = vld [vmem:[#allocation3 + $0x1b8] sm:$0xf]
    %v157 = vld [vmem:[#allocation3 + $0x1bc] sm:$0xf]
    %v158 = vld [vmem:[#allocation3 + $0x1c0] sm:$0xf]
    %v159 = vld [vmem:[#allocation3 + $0x1c4] sm:$0xf]
    %v160 = vld [vmem:[#allocation3 + $0x1c8] sm:$0xf]
    %v161 = vld [vmem:[#allocation3 + $0x1cc] sm:$0xf]
    %v162 = vld [vmem:[#allocation3 + $0x1d0] sm:$0xf]
    %v163 = vld [vmem:[#allocation3 + $0x1d4] sm:$0xf]
    %v164 = vld [vmem:[#allocation3 + $0x1d8] sm:$0xf]
    %v165 = vld [vmem:[#allocation3 + $0x1dc] sm:$0xf]
    %v166 = vld [vmem:[#allocation3 + $0x1e0] sm:$0xf]
    %v167 = vld [vmem:[#allocation3 + $0x1e4] sm:$0xf]
    %v168 = vld [vmem:[#allocation3 + $0x1e8] sm:$0xf]
    %v169 = vld [vmem:[#allocation3 + $0x1ec] sm:$0xf]
    %v170 = vld [vmem:[#allocation3 + $0x1f0] sm:$0xf]
    %v171 = vld [vmem:[#allocation3 + $0x1f4] sm:$0xf]
    %v172 = vld [vmem:[#allocation3 + $0x1f8] sm:$0xf]
    %v173 = vld [vmem:[#allocation3 + $0x1fc] sm:$0xf]
    %v174 = vld [vmem:[#allocation3 + $0x200] sm:$0xf]
    %v175 = vld [vmem:[#allocation3 + $0x204] sm:$0xf]
    %v176 = vld [vmem:[#allocation3 + $0x208] sm:$0xf]
    %v177 = vld [vmem:[#allocation3 + $0x20c] sm:$0xf]
    %v178 = vld [vmem:[#allocation3 + $0x210] sm:$0xf]
    %v179 = vld [vmem:[#allocation3 + $0x214] sm:$0xf]
    %v180 = vld [vmem:[#allocation3 + $0x218] sm:$0xf]
    %v181 = vld [vmem:[#allocation3 + $0x21c] sm:$0xf]
    %v182 = vld [vmem:[#allocation3 + $0x220] sm:$0xf]
    %v183 = vld [vmem:[#allocation3 + $0x224] sm:$0xf]
    %v184 = vld [vmem:[#allocation3 + $0x228] sm:$0xf]
    %v185 = vld [vmem:[#allocation3 + $0x22c] sm:$0xf]
    %v186 = vld [vmem:[#allocation3 + $0x230] sm:$0xf]
    %v187 = vld [vmem:[#allocation3 + $0x234] sm:$0xf]
    %v188 = vld [vmem:[#allocation3 + $0x238] sm:$0xf]
    %v189 = vld [vmem:[#allocation3 + $0x23c] sm:$0xf]
    %v190 = vld [vmem:[#allocation3 + $0x240] sm:$0xf]
    %v191 = vld [vmem:[#allocation3 + $0x244] sm:$0xf]
    %v192 = vld [vmem:[#allocation3 + $0x248] sm:$0xf]
    %v193 = vld [vmem:[#allocation3 + $0x24c] sm:$0xf]
    %v194 = vld [vmem:[#allocation3 + $0x250] sm:$0xf]
    %v195 = vld [vmem:[#allocation3 + $0x254] sm:$0xf]
    %v196 = vld [vmem:[#allocation3 + $0x258] sm:$0xf]
    %v197 = vld [vmem:[#allocation3 + $0x25c] sm:$0xf]
    %v198 = vld [vmem:[#allocation3 + $0x260] sm:$0xf]
    %v199 = vld [vmem:[#allocation3 + $0x264] sm:$0xf]
    %v200 = vld [vmem:[#allocation3 + $0x268] sm:$0xf]
    %v201 = vld [vmem:[#allocation3 + $0x26c] sm:$0xf]
    %v202 = vld [vmem:[#allocation3 + $0x270] sm:$0xf]
    %v203 = vld [vmem:[#allocation3 + $0x274] sm:$0xf]
    %v204 = vld [vmem:[#allocation3 + $0x278] sm:$0xf]
    %v205 = vld [vmem:[#allocation3 + $0x27c] sm:$0xf]
    %v206 = vld [vmem:[#allocation3 + $0x280] sm:$0xf]
    %v207 = vld [vmem:[#allocation3 + $0x284] sm:$0xf]
    %v208 = vld [vmem:[#allocation3 + $0x288] sm:$0xf]
    %v209 = vld [vmem:[#allocation3 + $0x28c] sm:$0xf]
    %v210 = vld [vmem:[#allocation3 + $0x290] sm:$0xf]
    %v211 = vld [vmem:[#allocation3 + $0x294] sm:$0xf]
    %v212 = vld [vmem:[#allocation3 + $0x298] sm:$0xf]
    %v213 = vld [vmem:[#allocation3 + $0x29c] sm:$0xf]
    %v214 = vld [vmem:[#allocation3 + $0x2a0] sm:$0xf]
    %v215 = vld [vmem:[#allocation3 + $0x2a4] sm:$0xf]
    %v216 = vld [vmem:[#allocation3 + $0x2a8] sm:$0xf]
    %v217 = vld [vmem:[#allocation3 + $0x2ac] sm:$0xf]
    %v218 = vld [vmem:[#allocation3 + $0x2b0] sm:$0xf]
    %v219 = vld [vmem:[#allocation3 + $0x2b4] sm:$0xf]
    %v220 = vld [vmem:[#allocation3 + $0x2b8] sm:$0xf]
    %v221 = vld [vmem:[#allocation3 + $0x2bc] sm:$0xf]
    %v222 = vld [vmem:[#allocation3 + $0x2c0] sm:$0xf]
    %v223 = vld [vmem:[#allocation3 + $0x2c4] sm:$0xf]
    %v224 = vld [vmem:[#allocation3 + $0x2c8] sm:$0xf]
    %v225 = vld [vmem:[#allocation3 + $0x2cc] sm:$0xf]
    %v226 = vld [vmem:[#allocation3 + $0x2d0] sm:$0xf]
    %v227 = vld [vmem:[#allocation3 + $0x2d4] sm:$0xf]
    %v228 = vld [vmem:[#allocation3 + $0x2d8] sm:$0xf]
    %v229 = vld [vmem:[#allocation3 + $0x2dc] sm:$0xf]
    %v230 = vld [vmem:[#allocation3 + $0x2e0] sm:$0xf]
    %v231 = vld [vmem:[#allocation3 + $0x2e4] sm:$0xf]
    %v232 = vld [vmem:[#allocation3 + $0x2e8] sm:$0xf]
    %v233 = vld [vmem:[#allocation3 + $0x2ec] sm:$0xf]
    %v234 = vld [vmem:[#allocation3 + $0x2f0] sm:$0xf]
    %v235 = vld [vmem:[#allocation3 + $0x2f4] sm:$0xf]
    %v236 = vld [vmem:[#allocation3 + $0x2f8] sm:$0xf]
    %v237 = vld [vmem:[#allocation3 + $0x2fc] sm:$0xf]
    %v238 = vld [vmem:[#allocation3 + $0x300] sm:$0xf]
    %v239 = vld [vmem:[#allocation3 + $0x304] sm:$0xf]
    %v240 = vld [vmem:[#allocation3 + $0x308] sm:$0xf]
    %v241 = vld [vmem:[#allocation3 + $0x30c] sm:$0xf]
    %v242 = vld [vmem:[#allocation3 + $0x310] sm:$0xf]
    %v243 = vld [vmem:[#allocation3 + $0x314] sm:$0xf]
    %v244 = vld [vmem:[#allocation3 + $0x318] sm:$0xf]
    %v245 = vld [vmem:[#allocation3 + $0x31c] sm:$0xf]
    %v246 = vld [vmem:[#allocation3 + $0x320] sm:$0xf]
    %v247 = vld [vmem:[#allocation3 + $0x324] sm:$0xf]
    %v248 = vld [vmem:[#allocation3 + $0x328] sm:$0xf]
    %v249 = vld [vmem:[#allocation3 + $0x32c] sm:$0xf]
    %v250 = vld [vmem:[#allocation3 + $0x330] sm:$0xf]
    %v251 = vld [vmem:[#allocation3 + $0x334] sm:$0xf]
    %v252 = vld [vmem:[#allocation3 + $0x338] sm:$0xf]
    %v253 = vld [vmem:[#allocation3 + $0x33c] sm:$0xf]
    %v254 = vld [vmem:[#allocation3 + $0x340] sm:$0xf]
    %v255 = vld [vmem:[#allocation3 + $0x344] sm:$0xf]
    %v256 = vld [vmem:[#allocation3 + $0x348] sm:$0xf]
    %v257 = vld [vmem:[#allocation3 + $0x34c] sm:$0xf]
    %v258 = vld [vmem:[#allocation3 + $0x350] sm:$0xf]
    %v259 = vld [vmem:[#allocation3 + $0x354] sm:$0xf]
    %v260 = vld [vmem:[#allocation3 + $0x358] sm:$0xf]
    %v261 = vld [vmem:[#allocation3 + $0x35c] sm:$0xf]
    %v262 = vld [vmem:[#allocation3 + $0x360] sm:$0xf]
    %v263 = vld [vmem:[#allocation3 + $0x364] sm:$0xf]
    %v264 = vld [vmem:[#allocation3 + $0x368] sm:$0xf]
    %v265 = vld [vmem:[#allocation3 + $0x36c] sm:$0xf]
    %v266 = vld [vmem:[#allocation3 + $0x370] sm:$0xf]
    %v267 = vld [vmem:[#allocation3 + $0x374] sm:$0xf]
    %v268 = vld [vmem:[#allocation3 + $0x378] sm:$0xf]
    %v269 = vld [vmem:[#allocation3 + $0x37c] sm:$0xf]
    %v270 = vld [vmem:[#allocation3 + $0x380] sm:$0xf]
    %v271 = vld [vmem:[#allocation3 + $0x384] sm:$0xf]
    %v272 = vld [vmem:[#allocation3 + $0x388] sm:$0xf]
    %v273 = vld [vmem:[#allocation3 + $0x38c] sm:$0xf]
    %v274 = vld [vmem:[#allocation3 + $0x390] sm:$0xf]
    %v275 = vld [vmem:[#allocation3 + $0x394] sm:$0xf]
    %v276 = vld [vmem:[#allocation3 + $0x398] sm:$0xf]
    %v277 = vld [vmem:[#allocation3 + $0x39c] sm:$0xf]
    %v278 = vld [vmem:[#allocation3 + $0x3a0] sm:$0xf]
    %v279 = vld [vmem:[#allocation3 + $0x3a4] sm:$0xf]
    %v280 = vld [vmem:[#allocation3 + $0x3a8] sm:$0xf]
    %v281 = vld [vmem:[#allocation3 + $0x3ac] sm:$0xf]
    %v282 = vld [vmem:[#allocation3 + $0x3b0] sm:$0xf]
    %v283 = vld [vmem:[#allocation3 + $0x3b4] sm:$0xf]
    %v284 = vld [vmem:[#allocation3 + $0x3b8] sm:$0xf]
    %v285 = vld [vmem:[#allocation3 + $0x3bc] sm:$0xf]
    %v286 = vld [vmem:[#allocation3 + $0x3c0] sm:$0xf]
    %v287 = vld [vmem:[#allocation3 + $0x3c4] sm:$0xf]
    %v288 = vld [vmem:[#allocation3 + $0x3c8] sm:$0xf]
    %v289 = vld [vmem:[#allocation3 + $0x3cc] sm:$0xf]
    %v290 = vld [vmem:[#allocation3 + $0x3d0] sm:$0xf]
    %v291 = vld [vmem:[#allocation3 + $0x3d4] sm:$0xf]
    %v292 = vld [vmem:[#allocation3 + $0x3d8] sm:$0xf]
    %v293 = vld [vmem:[#allocation3 + $0x3dc] sm:$0xf]
    %v294 = vld [vmem:[#allocation3 + $0x3e0] sm:$0xf]
    %v295 = vld [vmem:[#allocation3 + $0x3e4] sm:$0xf]
    %v296 = vld [vmem:[#allocation3 + $0x3e8] sm:$0xf]
    %v297 = vld [vmem:[#allocation3 + $0x3ec] sm:$0xf]
    %v298 = vld [vmem:[#allocation3 + $0x3f0] sm:$0xf]
    %v299 = vld [vmem:[#allocation3 + $0x3f4] sm:$0xf]
    %v300 = vld [vmem:[#allocation3 + $0x3f8] sm:$0xf]
    %v301 = vld [vmem:[#allocation3 + $0x3fc] sm:$0xf]
    %v302 = vld [vmem:[#allocation3 + $0x400] sm:$0xf]
    %v303 = vld [vmem:[#allocation3 + $0x404] sm:$0xf]
    %v304 = vld [vmem:[#allocation3 + $0x408] sm:$0xf]
    %v305 = vld [vmem:[#allocation3 + $0x40c] sm:$0xf]
    %v306 = vld [vmem:[#allocation3 + $0x410] sm:$0xf]
    %v307 = vld [vmem:[#allocation3 + $0x414] sm:$0xf]
    %v308 = vld [vmem:[#allocation3 + $0x418] sm:$0xf]
    %v309 = vld [vmem:[#allocation3 + $0x41c] sm:$0xf]
    %v310 = vld [vmem:[#allocation3 + $0x420] sm:$0xf]
    %v311 = vld [vmem:[#allocation3 + $0x424] sm:$0xf]
    %v312 = vld [vmem:[#allocation3 + $0x428] sm:$0xf]
    %v313 = vld [vmem:[#allocation3 + $0x42c] sm:$0xf]
    %v314 = vld [vmem:[#allocation3 + $0x430] sm:$0xf]
    %v315 = vld [vmem:[#allocation3 + $0x434] sm:$0xf]
    %v316 = vld [vmem:[#allocation3 + $0x438] sm:$0xf]
    %v317 = vld [vmem:[#allocation3 + $0x43c] sm:$0xf]
    %v318 = vld [vmem:[#allocation3 + $0x440] sm:$0xf]
    %v319 = vld [vmem:[#allocation3 + $0x444] sm:$0xf]
    %v320 = vld [vmem:[#allocation3 + $0x448] sm:$0xf]
    %v321 = vld [vmem:[#allocation3 + $0x44c] sm:$0xf]
    %v322 = vld [vmem:[#allocation3 + $0x450] sm:$0xf]
    %v323 = vld [vmem:[#allocation3 + $0x454] sm:$0xf]
    %v324 = vld [vmem:[#allocation3 + $0x458] sm:$0xf]
    %v325 = vld [vmem:[#allocation3 + $0x45c] sm:$0xf]
    %v326 = vld [vmem:[#allocation3 + $0x460] sm:$0xf]
    %v327 = vld [vmem:[#allocation3 + $0x464] sm:$0xf]
    %v328 = vld [vmem:[#allocation3 + $0x468] sm:$0xf]
    %v329 = vld [vmem:[#allocation3 + $0x46c] sm:$0xf]
    %v330 = vld [vmem:[#allocation3 + $0x470] sm:$0xf]
    %v331 = vld [vmem:[#allocation3 + $0x474] sm:$0xf]
    %v332 = vld [vmem:[#allocation3 + $0x478] sm:$0xf]
    %v333 = vld [vmem:[#allocation3 + $0x47c] sm:$0xf]
    %335 = vst [vmem:[#allocation1] ss:$9 sm:$0xff] %v43
    %v336 = vld [vmem:[#allocation1] sm:$0xff]
    %v337 = vld [vmem:[#allocation1 + $0x9] sm:$0xff]
    %v338 = vld [vmem:[#allocation1 + $0x12] sm:$0xff]
    %v339 = vld [vmem:[#allocation1 + $0x1b] sm:$0xff]
    %v340 = vld [vmem:[#allocation1 + $0x24] sm:$0xff]
    %v341 = vld [vmem:[#allocation1 + $0x2d] sm:$0xff]
    %v342 = vld [vmem:[#allocation1 + $0x36] sm:$0xff]
    %v343 = vld [vmem:[#allocation1 + $0x3f] sm:$0xff]
    %345 = vst [vmem:[#allocation1] ss:$9 sm:$0xff] %v44
    %v346 = vld [vmem:[#allocation1] sm:$0xff]
    %v347 = vld [vmem:[#allocation1 + $0x9] sm:$0xff]
    %v348 = vld [vmem:[#allocation1 + $0x12] sm:$0xff]
    %v349 = vld [vmem:[#allocation1 + $0x1b] sm:$0xff]
    %v350 = vld [vmem:[#allocation1 + $0x24] sm:$0xff]
    %v351 = vld [vmem:[#allocation1 + $0x2d] sm:$0xff]
    %v352 = vld [vmem:[#allocation1 + $0x36] sm:$0xff]
    %v353 = vld [vmem:[#allocation1 + $0x3f] sm:$0xff]
    %355 = vst [vmem:[#allocation1] ss:$9 sm:$0xff] %v45
    %v356 = vld [vmem:[#allocation1] sm:$0xff]
    %v357 = vld [vmem:[#allocation1 + $0x9] sm:$0xff]
    %v664 = vunpack.c.l.b16 %v46
    %v665 = vunpack.c.l.b16 %v47
    %v666 = vunpack.c.l.b16 %v48
    %v667 = vunpack.c.l.b16 %v49
    %v668 = vunpack.c.l.b16 %v50
    %v669 = vunpack.c.l.b16 %v51
    %v670 = vunpack.c.l.b16 %v52
    %v671 = vunpack.c.l.b16 %v53
    %v672 = vunpack.c.l.b16 %v54
    %v673 = vunpack.c.l.b16 %v55
    %v674 = vunpack.c.l.b16 %v56
    %v675 = vunpack.c.l.b16 %v57
    %v676 = vunpack.c.l.b16 %v58
    %v677 = vunpack.c.l.b16 %v59
    %v678 = vunpack.c.l.b16 %v60
    %v679 = vunpack.c.l.b16 %v61
    %v680 = vunpack.c.l.b16 %v62
    %v681 = vunpack.c.l.b16 %v63
    %v682 = vunpack.c.l.b16 %v64
    %v683 = vunpack.c.l.b16 %v65
    %v684 = vunpack.c.l.b16 %v66
    %v685 = vunpack.c.l.b16 %v67
    %v686 = vunpack.c.l.b16 %v68
    %v687 = vunpack.c.l.b16 %v69
    %v688 = vunpack.c.l.b16 %v70
    %v689 = vunpack.c.l.b16 %v71
    %v690 = vunpack.c.l.b16 %v72
    %v691 = vunpack.c.l.b16 %v73
    %v692 = vunpack.c.l.b16 %v74
    %v693 = vunpack.c.l.b16 %v75
    %v694 = vunpack.c.l.b16 %v76
    %v695 = vunpack.c.l.b16 %v77
    %v696 = vunpack.c.l.b16 %v78
    %v697 = vunpack.c.l.b16 %v79
    %v698 = vunpack.c.l.b16 %v80
    %v699 = vunpack.c.l.b16 %v81
    %v700 = vunpack.c.l.b16 %v82
    %v701 = vunpack.c.l.b16 %v83
    %v702 = vunpack.c.l.b16 %v84
    %v703 = vunpack.c.l.b16 %v85
    %v704 = vunpack.c.l.b16 %v86
    %v705 = vunpack.c.l.b16 %v87
    %v706 = vunpack.c.l.b16 %v88
    %v707 = vunpack.c.l.b16 %v89
    %v708 = vunpack.c.l.b16 %v90
    %v709 = vunpack.c.l.b16 %v91
    %v710 = vunpack.c.l.b16 %v92
    %v711 = vunpack.c.l.b16 %v93
    %v712 = vunpack.c.l.b16 %v94
    %v713 = vunpack.c.l.b16 %v95
    %v714 = vunpack.c.l.b16 %v96
    %v715 = vunpack.c.l.b16 %v97
    %v716 = vunpack.c.l.b16 %v98
    %v717 = vunpack.c.l.b16 %v99
    %v718 = vunpack.c.l.b16 %v100
    %v719 = vunpack.c.l.b16 %v101
    %v720 = vunpack.c.l.b16 %v102
    %v721 = vunpack.c.l.b16 %v103
    %v722 = vunpack.c.l.b16 %v104
    %v723 = vunpack.c.l.b16 %v105
    %v724 = vunpack.c.l.b16 %v106
    %v725 = vunpack.c.l.b16 %v107
    %v726 = vunpack.c.l.b16 %v108
    %v727 = vunpack.c.l.b16 %v109
    %v728 = vunpack.c.l.b16 %v110
    %v729 = vunpack.c.l.b16 %v111
    %v730 = vunpack.c.l.b16 %v112
    %v731 = vunpack.c.l.b16 %v113
    %v732 = vunpack.c.l.b16 %v114
    %v733 = vunpack.c.l.b16 %v115
    %v734 = vunpack.c.l.b16 %v116
    %v735 = vunpack.c.l.b16 %v117
    %v736 = vunpack.c.l.b16 %v118
    %v737 = vunpack.c.l.b16 %v119
    %v738 = vunpack.c.l.b16 %v120
    %v739 = vunpack.c.l.b16 %v121
    %v740 = vunpack.c.l.b16 %v122
    %v741 = vunpack.c.l.b16 %v123
    %v742 = vunpack.c.l.b16 %v124
    %v743 = vunpack.c.l.b16 %v125
    %v744 = vunpack.c.l.b16 %v126
    %v745 = vunpack.c.l.b16 %v127
    %v746 = vunpack.c.l.b16 %v128
    %v747 = vunpack.c.l.b16 %v129
    %v748 = vunpack.c.l.b16 %v130
    %v749 = vunpack.c.l.b16 %v131
    %v750 = vunpack.c.l.b16 %v132
    %v751 = vunpack.c.l.b16 %v133
    %v752 = vunpack.c.l.b16 %v134
    %v753 = vunpack.c.l.b16 %v135
    %v754 = vunpack.c.l.b16 %v136
    %v755 = vunpack.c.l.b16 %v137
    %v756 = vunpack.c.l.b16 %v138
    %v757 = vunpack.c.l.b16 %v139
    %v758 = vunpack.c.l.b16 %v140
    %v759 = vunpack.c.l.b16 %v141
    %v760 = vunpack.c.l.b16 %v142
    %v761 = vunpack.c.l.b16 %v143
    %v762 = vunpack.c.l.b16 %v144
    %v763 = vunpack.c.l.b16 %v145
    %v764 = vunpack.c.l.b16 %v146
    %v765 = vunpack.c.l.b16 %v147
    %v766 = vunpack.c.l.b16 %v148
    %v767 = vunpack.c.l.b16 %v149
    %v768 = vunpack.c.l.b16 %v150
    %v769 = vunpack.c.l.b16 %v151
    %v770 = vunpack.c.l.b16 %v152
    %v771 = vunpack.c.l.b16 %v153
    %v772 = vunpack.c.l.b16 %v154
    %v773 = vunpack.c.l.b16 %v155
    %v774 = vunpack.c.l.b16 %v156
    %v775 = vunpack.c.l.b16 %v157
    %v776 = vunpack.c.l.b16 %v158
    %v777 = vunpack.c.l.b16 %v159
    %v778 = vunpack.c.l.b16 %v160
    %v779 = vunpack.c.l.b16 %v161
    %v780 = vunpack.c.l.b16 %v162
    %v781 = vunpack.c.l.b16 %v163
    %v782 = vunpack.c.l.b16 %v164
    %v783 = vunpack.c.l.b16 %v165
    %v784 = vunpack.c.l.b16 %v166
    %v785 = vunpack.c.l.b16 %v167
    %v786 = vunpack.c.l.b16 %v168
    %v787 = vunpack.c.l.b16 %v169
    %v788 = vunpack.c.l.b16 %v170
    %v789 = vunpack.c.l.b16 %v171
    %v790 = vunpack.c.l.b16 %v172
    %v791 = vunpack.c.l.b16 %v173
    %v792 = vunpack.c.l.b16 %v174
    %v793 = vunpack.c.l.b16 %v175
    %v794 = vunpack.c.l.b16 %v176
    %v795 = vunpack.c.l.b16 %v177
    %v796 = vunpack.c.l.b16 %v178
    %v797 = vunpack.c.l.b16 %v179
    %v798 = vunpack.c.l.b16 %v180
    %v799 = vunpack.c.l.b16 %v181
    %v800 = vunpack.c.l.b16 %v182
    %v801 = vunpack.c.l.b16 %v183
    %v802 = vunpack.c.l.b16 %v184
    %v803 = vunpack.c.l.b16 %v185
    %v804 = vunpack.c.l.b16 %v186
    %v805 = vunpack.c.l.b16 %v187
    %v806 = vunpack.c.l.b16 %v188
    %v807 = vunpack.c.l.b16 %v189
    %v808 = vunpack.c.l.b16 %v190
    %v809 = vunpack.c.l.b16 %v191
    %v810 = vunpack.c.l.b16 %v192
    %v811 = vunpack.c.l.b16 %v193
    %v812 = vunpack.c.l.b16 %v194
    %v813 = vunpack.c.l.b16 %v195
    %v814 = vunpack.c.l.b16 %v196
    %v815 = vunpack.c.l.b16 %v197
    %v816 = vunpack.c.l.b16 %v198
    %v817 = vunpack.c.l.b16 %v199
    %v818 = vunpack.c.l.b16 %v200
    %v819 = vunpack.c.l.b16 %v201
    %v820 = vunpack.c.l.b16 %v202
    %v821 = vunpack.c.l.b16 %v203
    %v822 = vunpack.c.l.b16 %v204
    %v823 = vunpack.c.l.b16 %v205
    %v824 = vunpack.c.l.b16 %v206
    %v825 = vunpack.c.l.b16 %v207
    %v826 = vunpack.c.l.b16 %v208
    %v827 = vunpack.c.l.b16 %v209
    %v828 = vunpack.c.l.b16 %v210
    %v829 = vunpack.c.l.b16 %v211
    %v830 = vunpack.c.l.b16 %v212
    %v831 = vunpack.c.l.b16 %v213
    %v832 = vunpack.c.l.b16 %v214
    %v833 = vunpack.c.l.b16 %v215
    %v834 = vunpack.c.l.b16 %v216
    %v835 = vunpack.c.l.b16 %v217
    %v836 = vunpack.c.l.b16 %v218
    %v837 = vunpack.c.l.b16 %v219
    %v838 = vunpack.c.l.b16 %v220
    %v839 = vunpack.c.l.b16 %v221
    %v840 = vunpack.c.l.b16 %v222
    %v841 = vunpack.c.l.b16 %v223
    %v842 = vunpack.c.l.b16 %v224
    %v843 = vunpack.c.l.b16 %v225
    %v844 = vunpack.c.l.b16 %v226
    %v845 = vunpack.c.l.b16 %v227
    %v846 = vunpack.c.l.b16 %v228
    %v847 = vunpack.c.l.b16 %v229
    %v848 = vunpack.c.l.b16 %v230
    %v849 = vunpack.c.l.b16 %v231
    %v850 = vunpack.c.l.b16 %v232
    %v851 = vunpack.c.l.b16 %v233
    %v852 = vunpack.c.l.b16 %v234
    %v853 = vunpack.c.l.b16 %v235
    %v854 = vunpack.c.l.b16 %v236
    %v855 = vunpack.c.l.b16 %v237
    %v856 = vunpack.c.l.b16 %v238
    %v857 = vunpack.c.l.b16 %v239
    %v858 = vunpack.c.l.b16 %v240
    %v859 = vunpack.c.l.b16 %v241
    %v860 = vunpack.c.l.b16 %v242
    %v861 = vunpack.c.l.b16 %v243
    %v862 = vunpack.c.l.b16 %v244
    %v863 = vunpack.c.l.b16 %v245
    %v864 = vunpack.c.l.b16 %v246
    %v865 = vunpack.c.l.b16 %v247
    %v866 = vunpack.c.l.b16 %v248
    %v867 = vunpack.c.l.b16 %v249
    %v868 = vunpack.c.l.b16 %v250
    %v869 = vunpack.c.l.b16 %v251
    %v870 = vunpack.c.l.b16 %v252
    %v871 = vunpack.c.l.b16 %v253
    %v872 = vunpack.c.l.b16 %v254
    %v873 = vunpack.c.l.b16 %v255
    %v874 = vunpack.c.l.b16 %v256
    %v875 = vunpack.c.l.b16 %v257
    %v876 = vunpack.c.l.b16 %v258
    %v877 = vunpack.c.l.b16 %v259
    %v878 = vunpack.c.l.b16 %v260
    %v879 = vunpack.c.l.b16 %v261
    %v880 = vunpack.c.l.b16 %v262
    %v881 = vunpack.c.l.b16 %v263
    %v882 = vunpack.c.l.b16 %v264
    %v883 = vunpack.c.l.b16 %v265
    %v884 = vunpack.c.l.b16 %v266
    %v885 = vunpack.c.l.b16 %v267
    %v886 = vunpack.c.l.b16 %v268
    %v887 = vunpack.c.l.b16 %v269
    %v888 = vunpack.c.l.b16 %v270
    %v889 = vunpack.c.l.b16 %v271
    %v890 = vunpack.c.l.b16 %v272
    %v891 = vunpack.c.l.b16 %v273
    %v892 = vunpack.c.l.b16 %v274
    %v893 = vunpack.c.l.b16 %v275
    %v894 = vunpack.c.l.b16 %v276
    %v895 = vunpack.c.l.b16 %v277
    %v896 = vunpack.c.l.b16 %v278
    %v897 = vunpack.c.l.b16 %v279
    %v898 = vunpack.c.l.b16 %v280
    %v899 = vunpack.c.l.b16 %v281
    %v900 = vunpack.c.l.b16 %v282
    %v901 = vunpack.c.l.b16 %v283
    %v902 = vunpack.c.l.b16 %v284
    %v903 = vunpack.c.l.b16 %v285
    %v904 = vunpack.c.l.b16 %v286
    %v905 = vunpack.c.l.b16 %v287
    %v906 = vunpack.c.l.b16 %v288
    %v907 = vunpack.c.l.b16 %v289
    %v908 = vunpack.c.l.b16 %v290
    %v909 = vunpack.c.l.b16 %v291
    %v910 = vunpack.c.l.b16 %v292
    %v911 = vunpack.c.l.b16 %v293
    %v912 = vunpack.c.l.b16 %v294
    %v913 = vunpack.c.l.b16 %v295
    %v914 = vunpack.c.l.b16 %v296
    %v915 = vunpack.c.l.b16 %v297
    %v916 = vunpack.c.l.b16 %v298
    %v917 = vunpack.c.l.b16 %v299
    %v918 = vunpack.c.l.b16 %v300
    %v919 = vunpack.c.l.b16 %v301
    %v920 = vunpack.c.l.b16 %v302
    %v921 = vunpack.c.l.b16 %v303
    %v922 = vunpack.c.l.b16 %v304
    %v923 = vunpack.c.l.b16 %v305
    %v924 = vunpack.c.l.b16 %v306
    %v925 = vunpack.c.l.b16 %v307
    %v926 = vunpack.c.l.b16 %v308
    %v927 = vunpack.c.l.b16 %v309
    %v928 = vunpack.c.l.b16 %v310
    %v929 = vunpack.c.l.b16 %v311
    %v930 = vunpack.c.l.b16 %v312
    %v931 = vunpack.c.l.b16 %v313
    %v932 = vunpack.c.l.b16 %v314
    %v933 = vunpack.c.l.b16 %v315
    %v934 = vunpack.c.l.b16 %v316
    %v935 = vunpack.c.l.b16 %v317
    %v936 = vunpack.c.l.b16 %v318
    %v937 = vunpack.c.l.b16 %v319
    %v938 = vunpack.c.l.b16 %v320
    %v939 = vunpack.c.l.b16 %v321
    %v940 = vunpack.c.l.b16 %v322
    %v941 = vunpack.c.l.b16 %v323
    %v942 = vunpack.c.l.b16 %v324
    %v943 = vunpack.c.l.b16 %v325
    %v944 = vunpack.c.l.b16 %v326
    %v945 = vunpack.c.l.b16 %v327
    %v946 = vunpack.c.l.b16 %v328
    %v947 = vunpack.c.l.b16 %v329
    %v948 = vunpack.c.l.b16 %v330
    %v949 = vunpack.c.l.b16 %v331
    %v950 = vunpack.c.l.b16 %v332
    %v951 = vunpack.c.l.b16 %v333
    %v952 = vpack.c.b16 %v665, %v664
    %v953 = vpack.c.b16 %v667, %v666
    %v954 = vpack.c.b16 %v669, %v668
    %v955 = vpack.c.b16 %v671, %v670
    %v956 = vpack.c.b16 %v673, %v672
    %v957 = vpack.c.b16 %v675, %v674
    %v958 = vpack.c.b16 %v677, %v676
    %v959 = vpack.c.b16 %v679, %v678
    %v960 = vpack.c.b16 %v681, %v680
    %v961 = vpack.c.b16 %v683, %v682
    %v962 = vpack.c.b16 %v685, %v684
    %v963 = vpack.c.b16 %v687, %v686
    %v964 = vpack.c.b16 %v689, %v688
    %v965 = vpack.c.b16 %v691, %v690
    %v966 = vpack.c.b16 %v693, %v692
    %v967 = vpack.c.b16 %v695, %v694
    %v968 = vpack.c.b16 %v697, %v696
    %v969 = vpack.c.b16 %v699, %v698
    %v970 = vpack.c.b16 %v701, %v700
    %v971 = vpack.c.b16 %v703, %v702
    %v972 = vpack.c.b16 %v705, %v704
    %v973 = vpack.c.b16 %v707, %v706
    %v974 = vpack.c.b16 %v709, %v708
    %v975 = vpack.c.b16 %v711, %v710
    %v976 = vpack.c.b16 %v713, %v712
    %v977 = vpack.c.b16 %v715, %v714
    %v978 = vpack.c.b16 %v717, %v716
    %v979 = vpack.c.b16 %v719, %v718
    %v980 = vpack.c.b16 %v721, %v720
    %v981 = vpack.c.b16 %v723, %v722
    %v982 = vpack.c.b16 %v725, %v724
    %v983 = vpack.c.b16 %v727, %v726
    %v984 = vpack.c.b16 %v729, %v728
    %v985 = vpack.c.b16 %v731, %v730
    %v986 = vpack.c.b16 %v733, %v732
    %v987 = vpack.c.b16 %v735, %v734
    %v988 = vpack.c.b16 %v737, %v736
    %v989 = vpack.c.b16 %v739, %v738
    %v990 = vpack.c.b16 %v741, %v740
    %v991 = vpack.c.b16 %v743, %v742
    %v992 = vpack.c.b16 %v745, %v744
    %v993 = vpack.c.b16 %v747, %v746
    %v994 = vpack.c.b16 %v749, %v748
    %v995 = vpack.c.b16 %v751, %v750
    %v996 = vpack.c.b16 %v753, %v752
    %v997 = vpack.c.b16 %v755, %v754
    %v998 = vpack.c.b16 %v757, %v756
    %v999 = vpack.c.b16 %v759, %v758
    %v1000 = vpack.c.b16 %v761, %v760
    %v1001 = vpack.c.b16 %v763, %v762
    %v1002 = vpack.c.b16 %v765, %v764
    %v1003 = vpack.c.b16 %v767, %v766
    %v1004 = vpack.c.b16 %v769, %v768
    %v1005 = vpack.c.b16 %v771, %v770
    %v1006 = vpack.c.b16 %v773, %v772
    %v1007 = vpack.c.b16 %v775, %v774
    %v1008 = vpack.c.b16 %v777, %v776
    %v1009 = vpack.c.b16 %v779, %v778
    %v1010 = vpack.c.b16 %v781, %v780
    %v1011 = vpack.c.b16 %v783, %v782
    %v1012 = vpack.c.b16 %v785, %v784
    %v1013 = vpack.c.b16 %v787, %v786
    %v1014 = vpack.c.b16 %v789, %v788
    %v1015 = vpack.c.b16 %v791, %v790
    %v1016 = vpack.c.b16 %v793, %v792
    %v1017 = vpack.c.b16 %v795, %v794
    %v1018 = vpack.c.b16 %v797, %v796
    %v1019 = vpack.c.b16 %v799, %v798
    %v1020 = vpack.c.b16 %v801, %v800
    %v1021 = vpack.c.b16 %v803, %v802
    %v1022 = vpack.c.b16 %v805, %v804
    %v1023 = vpack.c.b16 %v807, %v806
    %v1024 = vpack.c.b16 %v809, %v808
    %v1025 = vpack.c.b16 %v811, %v810
    %v1026 = vpack.c.b16 %v813, %v812
    %v1027 = vpack.c.b16 %v815, %v814
    %v1028 = vpack.c.b16 %v817, %v816
    %v1029 = vpack.c.b16 %v819, %v818
    %v1030 = vpack.c.b16 %v821, %v820
    %v1031 = vpack.c.b16 %v823, %v822
    %v1032 = vpack.c.b16 %v825, %v824
    %v1033 = vpack.c.b16 %v827, %v826
    %v1034 = vpack.c.b16 %v829, %v828
    %v1035 = vpack.c.b16 %v831, %v830
    %v1036 = vpack.c.b16 %v833, %v832
    %v1037 = vpack.c.b16 %v835, %v834
    %v1038 = vpack.c.b16 %v837, %v836
    %v1039 = vpack.c.b16 %v839, %v838
    %v1040 = vpack.c.b16 %v841, %v840
    %v1041 = vpack.c.b16 %v843, %v842
    %v1042 = vpack.c.b16 %v845, %v844
    %v1043 = vpack.c.b16 %v847, %v846
    %v1044 = vpack.c.b16 %v849, %v848
    %v1045 = vpack.c.b16 %v851, %v850
    %v1046 = vpack.c.b16 %v853, %v852
    %v1047 = vpack.c.b16 %v855, %v854
    %v1048 = vpack.c.b16 %v857, %v856
    %v1049 = vpack.c.b16 %v859, %v858
    %v1050 = vpack.c.b16 %v861, %v860
    %v1051 = vpack.c.b16 %v863, %v862
    %v1052 = vpack.c.b16 %v865, %v864
    %v1053 = vpack.c.b16 %v867, %v866
    %v1054 = vpack.c.b16 %v869, %v868
    %v1055 = vpack.c.b16 %v871, %v870
    %v1056 = vpack.c.b16 %v873, %v872
    %v1057 = vpack.c.b16 %v875, %v874
    %v1058 = vpack.c.b16 %v877, %v876
    %v1059 = vpack.c.b16 %v879, %v878
    %v1060 = vpack.c.b16 %v881, %v880
    %v1061 = vpack.c.b16 %v883, %v882
    %v1062 = vpack.c.b16 %v885, %v884
    %v1063 = vpack.c.b16 %v887, %v886
    %v1064 = vpack.c.b16 %v889, %v888
    %v1065 = vpack.c.b16 %v891, %v890
    %v1066 = vpack.c.b16 %v893, %v892
    %v1067 = vpack.c.b16 %v895, %v894
    %v1068 = vpack.c.b16 %v897, %v896
    %v1069 = vpack.c.b16 %v899, %v898
    %v1070 = vpack.c.b16 %v901, %v900
    %v1071 = vpack.c.b16 %v903, %v902
    %v1072 = vpack.c.b16 %v905, %v904
    %v1073 = vpack.c.b16 %v907, %v906
    %v1074 = vpack.c.b16 %v909, %v908
    %v1075 = vpack.c.b16 %v911, %v910
    %v1076 = vpack.c.b16 %v913, %v912
    %v1077 = vpack.c.b16 %v915, %v914
    %v1078 = vpack.c.b16 %v917, %v916
    %v1079 = vpack.c.b16 %v919, %v918
    %v1080 = vpack.c.b16 %v921, %v920
    %v1081 = vpack.c.b16 %v923, %v922
    %v1082 = vpack.c.b16 %v925, %v924
    %v1083 = vpack.c.b16 %v927, %v926
    %v1084 = vpack.c.b16 %v929, %v928
    %v1085 = vpack.c.b16 %v931, %v930
    %v1086 = vpack.c.b16 %v933, %v932
    %v1087 = vpack.c.b16 %v935, %v934
    %v1088 = vpack.c.b16 %v937, %v936
    %v1089 = vpack.c.b16 %v939, %v938
    %v1090 = vpack.c.b16 %v941, %v940
    %v1091 = vpack.c.b16 %v943, %v942
    %v1092 = vpack.c.b16 %v945, %v944
    %v1093 = vpack.c.b16 %v947, %v946
    %v1094 = vpack.c.b16 %v949, %v948
    %v1095 = vpack.c.b16 %v951, %v950
    %1240 = vmatpush.bf16.msra.mxu0 %v959
    %1241 = vmatpush.bf16.msra.mxu0 %v958
    %1242 = vmatpush.bf16.msra.mxu0 %v957
    %1243 = vmatpush.bf16.msra.mxu0 %v956
    %1244 = vmatpush.bf16.msra.mxu0 %v955
    %1245 = vmatpush.bf16.msra.mxu0 %v954
    %1246 = vmatpush.bf16.msra.mxu0 %v953
    %1247 = vmatpush.bf16.msra.mxu0 %v952
    %1248 = vmatmul.bf16.gmra.mxu0 %v336
    %v1249 = vpop.f32.mrf.mxu0
    %v1250 = vadd.f32 0.0, %v1249
    %v1251 = vpop.f32.mrf.mxu0
    %1252 = vdwg.mxu0
    %1253 = vmatpush.bf16.msra.mxu0 %v967
    %1254 = vmatpush.bf16.msra.mxu0 %v966
    %1255 = vmatpush.bf16.msra.mxu0 %v965
    %1256 = vmatpush.bf16.msra.mxu0 %v964
    %1257 = vmatpush.bf16.msra.mxu0 %v963
    %1258 = vmatpush.bf16.msra.mxu0 %v962
    %1259 = vmatpush.bf16.msra.mxu0 %v961
    %1260 = vmatpush.bf16.msra.mxu0 %v960
    %1261 = vmatmul.bf16.gmra.mxu0 %v337
    %v1262 = vpop.f32.mrf.mxu0
    %v1263 = vadd.f32 %v1250, %v1262
    %v1264 = vpop.f32.mrf.mxu0
    %1265 = vdwg.mxu0
    %1266 = vmatpush.bf16.msra.mxu0 %v975
    %1267 = vmatpush.bf16.msra.mxu0 %v974
    %1268 = vmatpush.bf16.msra.mxu0 %v973
    %1269 = vmatpush.bf16.msra.mxu0 %v972
    %1270 = vmatpush.bf16.msra.mxu0 %v971
    %1271 = vmatpush.bf16.msra.mxu0 %v970
    %1272 = vmatpush.bf16.msra.mxu0 %v969
    %1273 = vmatpush.bf16.msra.mxu0 %v968
    %1274 = vmatmul.bf16.gmra.mxu0 %v338
    %v1275 = vpop.f32.mrf.mxu0
    %v1276 = vadd.f32 %v1263, %v1275
    %v1277 = vpop.f32.mrf.mxu0
    %1278 = vdwg.mxu0
    %1279 = vmatpush.bf16.msra.mxu0 %v983
    %1280 = vmatpush.bf16.msra.mxu0 %v982
    %1281 = vmatpush.bf16.msra.mxu0 %v981
    %1282 = vmatpush.bf16.msra.mxu0 %v980
    %1283 = vmatpush.bf16.msra.mxu0 %v979
    %1284 = vmatpush.bf16.msra.mxu0 %v978
    %1285 = vmatpush.bf16.msra.mxu0 %v977
    %1286 = vmatpush.bf16.msra.mxu0 %v976
    %1287 = vmatmul.bf16.gmra.mxu0 %v339
    %v1288 = vpop.f32.mrf.mxu0
    %v1289 = vadd.f32 %v1276, %v1288
    %v1290 = vpop.f32.mrf.mxu0
    %1291 = vdwg.mxu0
    %1292 = vmatpush.bf16.msra.mxu0 %v991
    %1293 = vmatpush.bf16.msra.mxu0 %v990
    %1294 = vmatpush.bf16.msra.mxu0 %v989
    %1295 = vmatpush.bf16.msra.mxu0 %v988
    %1296 = vmatpush.bf16.msra.mxu0 %v987
    %1297 = vmatpush.bf16.msra.mxu0 %v986
    %1298 = vmatpush.bf16.msra.mxu0 %v985
    %1299 = vmatpush.bf16.msra.mxu0 %v984
    %1300 = vmatmul.bf16.gmra.mxu0 %v340
    %v1301 = vpop.f32.mrf.mxu0
    %v1302 = vadd.f32 %v1289, %v1301
    %v1303 = vpop.f32.mrf.mxu0
    %1304 = vdwg.mxu0
    %1305 = vmatpush.bf16.msra.mxu0 %v999
    %1306 = vmatpush.bf16.msra.mxu0 %v998
    %1307 = vmatpush.bf16.msra.mxu0 %v997
    %1308 = vmatpush.bf16.msra.mxu0 %v996
    %1309 = vmatpush.bf16.msra.mxu0 %v995
    %1310 = vmatpush.bf16.msra.mxu0 %v994
    %1311 = vmatpush.bf16.msra.mxu0 %v993
    %1312 = vmatpush.bf16.msra.mxu0 %v992
    %1313 = vmatmul.bf16.gmra.mxu0 %v341
    %v1314 = vpop.f32.mrf.mxu0
    %v1315 = vadd.f32 %v1302, %v1314
    %v1316 = vpop.f32.mrf.mxu0
    %1317 = vdwg.mxu0
    %1318 = vmatpush.bf16.msra.mxu0 %v1007
    %1319 = vmatpush.bf16.msra.mxu0 %v1006
    %1320 = vmatpush.bf16.msra.mxu0 %v1005
    %1321 = vmatpush.bf16.msra.mxu0 %v1004
    %1322 = vmatpush.bf16.msra.mxu0 %v1003
    %1323 = vmatpush.bf16.msra.mxu0 %v1002
    %1324 = vmatpush.bf16.msra.mxu0 %v1001
    %1325 = vmatpush.bf16.msra.mxu0 %v1000
    %1326 = vmatmul.bf16.gmra.mxu0 %v342
    %v1327 = vpop.f32.mrf.mxu0
    %v1328 = vadd.f32 %v1315, %v1327
    %v1329 = vpop.f32.mrf.mxu0
    %1330 = vdwg.mxu0
    %1331 = vmatpush.bf16.msra.mxu0 %v1015
    %1332 = vmatpush.bf16.msra.mxu0 %v1014
    %1333 = vmatpush.bf16.msra.mxu0 %v1013
    %1334 = vmatpush.bf16.msra.mxu0 %v1012
    %1335 = vmatpush.bf16.msra.mxu0 %v1011
    %1336 = vmatpush.bf16.msra.mxu0 %v1010
    %1337 = vmatpush.bf16.msra.mxu0 %v1009
    %1338 = vmatpush.bf16.msra.mxu0 %v1008
    %1339 = vmatmul.bf16.gmra.mxu0 %v343
    %v1340 = vpop.f32.mrf.mxu0
    %v1341 = vadd.f32 %v1328, %v1340
    %v1342 = vpop.f32.mrf.mxu0
    %1343 = vdwg.mxu0
    %1344 = vmatpush.bf16.msra.mxu0 %v1023
    %1345 = vmatpush.bf16.msra.mxu0 %v1022
    %1346 = vmatpush.bf16.msra.mxu0 %v1021
    %1347 = vmatpush.bf16.msra.mxu0 %v1020
    %1348 = vmatpush.bf16.msra.mxu0 %v1019
    %1349 = vmatpush.bf16.msra.mxu0 %v1018
    %1350 = vmatpush.bf16.msra.mxu0 %v1017
    %1351 = vmatpush.bf16.msra.mxu0 %v1016
    %1352 = vmatmul.bf16.gmra.mxu0 %v346
    %v1353 = vpop.f32.mrf.mxu0
    %v1354 = vadd.f32 %v1341, %v1353
    %v1355 = vpop.f32.mrf.mxu0
    %1356 = vdwg.mxu0
    %1357 = vmatpush.bf16.msra.mxu0 %v1031
    %1358 = vmatpush.bf16.msra.mxu0 %v1030
    %1359 = vmatpush.bf16.msra.mxu0 %v1029
    %1360 = vmatpush.bf16.msra.mxu0 %v1028
    %1361 = vmatpush.bf16.msra.mxu0 %v1027
    %1362 = vmatpush.bf16.msra.mxu0 %v1026
    %1363 = vmatpush.bf16.msra.mxu0 %v1025
    %1364 = vmatpush.bf16.msra.mxu0 %v1024
    %1365 = vmatmul.bf16.gmra.mxu0 %v347
    %v1366 = vpop.f32.mrf.mxu0
    %v1367 = vadd.f32 %v1354, %v1366
    %v1368 = vpop.f32.mrf.mxu0
    %1369 = vdwg.mxu0
    %1370 = vmatpush.bf16.msra.mxu0 %v1039
    %1371 = vmatpush.bf16.msra.mxu0 %v1038
    %1372 = vmatpush.bf16.msra.mxu0 %v1037
    %1373 = vmatpush.bf16.msra.mxu0 %v1036
    %1374 = vmatpush.bf16.msra.mxu0 %v1035
    %1375 = vmatpush.bf16.msra.mxu0 %v1034
    %1376 = vmatpush.bf16.msra.mxu0 %v1033
    %1377 = vmatpush.bf16.msra.mxu0 %v1032
    %1378 = vmatmul.bf16.gmra.mxu0 %v348
    %v1379 = vpop.f32.mrf.mxu0
    %v1380 = vadd.f32 %v1367, %v1379
    %v1381 = vpop.f32.mrf.mxu0
    %1382 = vdwg.mxu0
    %1383 = vmatpush.bf16.msra.mxu0 %v1047
    %1384 = vmatpush.bf16.msra.mxu0 %v1046
    %1385 = vmatpush.bf16.msra.mxu0 %v1045
    %1386 = vmatpush.bf16.msra.mxu0 %v1044
    %1387 = vmatpush.bf16.msra.mxu0 %v1043
    %1388 = vmatpush.bf16.msra.mxu0 %v1042
    %1389 = vmatpush.bf16.msra.mxu0 %v1041
    %1390 = vmatpush.bf16.msra.mxu0 %v1040
    %1391 = vmatmul.bf16.gmra.mxu0 %v349
    %v1392 = vpop.f32.mrf.mxu0
    %v1393 = vadd.f32 %v1380, %v1392
    %v1394 = vpop.f32.mrf.mxu0
    %1395 = vdwg.mxu0
    %1396 = vmatpush.bf16.msra.mxu0 %v1055
    %1397 = vmatpush.bf16.msra.mxu0 %v1054
    %1398 = vmatpush.bf16.msra.mxu0 %v1053
    %1399 = vmatpush.bf16.msra.mxu0 %v1052
    %1400 = vmatpush.bf16.msra.mxu0 %v1051
    %1401 = vmatpush.bf16.msra.mxu0 %v1050
    %1402 = vmatpush.bf16.msra.mxu0 %v1049
    %1403 = vmatpush.bf16.msra.mxu0 %v1048
    %1404 = vmatmul.bf16.gmra.mxu0 %v350
    %v1405 = vpop.f32.mrf.mxu0
    %v1406 = vadd.f32 %v1393, %v1405
    %v1407 = vpop.f32.mrf.mxu0
    %1408 = vdwg.mxu0
    %1409 = vmatpush.bf16.msra.mxu0 %v1063
    %1410 = vmatpush.bf16.msra.mxu0 %v1062
    %1411 = vmatpush.bf16.msra.mxu0 %v1061
    %1412 = vmatpush.bf16.msra.mxu0 %v1060
    %1413 = vmatpush.bf16.msra.mxu0 %v1059
    %1414 = vmatpush.bf16.msra.mxu0 %v1058
    %1415 = vmatpush.bf16.msra.mxu0 %v1057
    %1416 = vmatpush.bf16.msra.mxu0 %v1056
    %1417 = vmatmul.bf16.gmra.mxu0 %v351
    %v1418 = vpop.f32.mrf.mxu0
    %v1419 = vadd.f32 %v1406, %v1418
    %v1420 = vpop.f32.mrf.mxu0
    %1421 = vdwg.mxu0
    %1422 = vmatpush.bf16.msra.mxu0 %v1071
    %1423 = vmatpush.bf16.msra.mxu0 %v1070
    %1424 = vmatpush.bf16.msra.mxu0 %v1069
    %1425 = vmatpush.bf16.msra.mxu0 %v1068
    %1426 = vmatpush.bf16.msra.mxu0 %v1067
    %1427 = vmatpush.bf16.msra.mxu0 %v1066
    %1428 = vmatpush.bf16.msra.mxu0 %v1065
    %1429 = vmatpush.bf16.msra.mxu0 %v1064
    %1430 = vmatmul.bf16.gmra.mxu0 %v352
    %v1431 = vpop.f32.mrf.mxu0
    %v1432 = vadd.f32 %v1419, %v1431
    %v1433 = vpop.f32.mrf.mxu0
    %1434 = vdwg.mxu0
    %1435 = vmatpush.bf16.msra.mxu0 %v1079
    %1436 = vmatpush.bf16.msra.mxu0 %v1078
    %1437 = vmatpush.bf16.msra.mxu0 %v1077
    %1438 = vmatpush.bf16.msra.mxu0 %v1076
    %1439 = vmatpush.bf16.msra.mxu0 %v1075
    %1440 = vmatpush.bf16.msra.mxu0 %v1074
    %1441 = vmatpush.bf16.msra.mxu0 %v1073
    %1442 = vmatpush.bf16.msra.mxu0 %v1072
    %1443 = vmatmul.bf16.gmra.mxu0 %v353
    %v1444 = vpop.f32.mrf.mxu0
    %v1445 = vadd.f32 %v1432, %v1444
    %v1446 = vpop.f32.mrf.mxu0
    %1447 = vdwg.mxu0
    %1448 = vmatpush.bf16.msra.mxu0 %v1087
    %1449 = vmatpush.bf16.msra.mxu0 %v1086
    %1450 = vmatpush.bf16.msra.mxu0 %v1085
    %1451 = vmatpush.bf16.msra.mxu0 %v1084
    %1452 = vmatpush.bf16.msra.mxu0 %v1083
    %1453 = vmatpush.bf16.msra.mxu0 %v1082
    %1454 = vmatpush.bf16.msra.mxu0 %v1081
    %1455 = vmatpush.bf16.msra.mxu0 %v1080
    %1456 = vmatmul.bf16.gmra.mxu0 %v356
    %v1457 = vpop.f32.mrf.mxu0
    %v1458 = vadd.f32 %v1445, %v1457
    %v1459 = vpop.f32.mrf.mxu0
    %1460 = vdwg.mxu0
    %1461 = vmatpush.bf16.msra.mxu0 %v1095
    %1462 = vmatpush.bf16.msra.mxu0 %v1094
    %1463 = vmatpush.bf16.msra.mxu0 %v1093
    %1464 = vmatpush.bf16.msra.mxu0 %v1092
    %1465 = vmatpush.bf16.msra.mxu0 %v1091
    %1466 = vmatpush.bf16.msra.mxu0 %v1090
    %1467 = vmatpush.bf16.msra.mxu0 %v1089
    %1468 = vmatpush.bf16.msra.mxu0 %v1088
    %1469 = vmatmul.bf16.gmra.mxu0 %v357
    %v1470 = vpop.f32.mrf.mxu0
    %v1471 = vadd.f32 %v1458, %v1470
    %v1472 = vpop.f32.mrf.mxu0
    %1473 = vdwg.mxu0
    %v1474 = vadd.f32 %v42, %v1471
    %1475 = vst [vmem:[#allocation2] sm:$0x3] %v1474
    // Predicated region
    $region30: #{phase_net_forward.3} parent=1 // pred_check
      %p1476 = pneg %p37
    $region31: #{phase_net_forward.3} parent=1 // pred_check_branch
      %1478 = sbr.rel (%p1476) target = $region33
    $region32: #{phase_net_forward.3} parent=1 // pred_region
      %v1479 = vld [vmem:[#allocation2] sm:$0x3]
      %v1480 = vld [vmem:[%s2] sm:$0x1]
      %v1482 = vperm.slane %v1480, 0
      %v1484 = vadd.f32 %v1479, %v1482
      %v1485 = vmax.f32 %v1484, 0.0
      %v1486 = vpack.c.bf16 %v1485, %v1485
      %v1487 = vld [vmem:[%s3] sm:$0xf]
      %v1488 = vld [vmem:[%s3 + $0x4] sm:$0xf]
      %v1489 = vld [vmem:[%s3 + $0x8] sm:$0xf]
      %v1490 = vld [vmem:[%s3 + $0xc] sm:$0xf]
      %v1491 = vld [vmem:[%s3 + $0x10] sm:$0xf]
      %v1492 = vld [vmem:[%s3 + $0x14] sm:$0xf]
      %v1493 = vld [vmem:[%s3 + $0x18] sm:$0xf]
      %v1494 = vld [vmem:[%s3 + $0x1c] sm:$0xf]
      %v1495 = vld [vmem:[%s3 + $0x20] sm:$0xf]
      %v1496 = vld [vmem:[%s3 + $0x24] sm:$0xf]
      %v1497 = vld [vmem:[%s3 + $0x28] sm:$0xf]
      %v1498 = vld [vmem:[%s3 + $0x2c] sm:$0xf]
      %v1499 = vld [vmem:[%s3 + $0x30] sm:$0xf]
      %v1500 = vld [vmem:[%s3 + $0x34] sm:$0xf]
      %v1501 = vld [vmem:[%s3 + $0x38] sm:$0xf]
      %v1502 = vld [vmem:[%s3 + $0x3c] sm:$0xf]
      %v1503 = vld [vmem:[%s4] sm:$0x1]
      %v1505 = vperm.slane %v1503, 0
      %v1523 = vunpack.c.l.b16 %v1487
      %v1524 = vunpack.c.l.b16 %v1488
      %v1525 = vunpack.c.l.b16 %v1489
      %v1526 = vunpack.c.l.b16 %v1490
      %v1527 = vunpack.c.l.b16 %v1491
      %v1528 = vunpack.c.l.b16 %v1492
      %v1529 = vunpack.c.l.b16 %v1493
      %v1530 = vunpack.c.l.b16 %v1494
      %v1531 = vunpack.c.l.b16 %v1495
      %v1532 = vunpack.c.l.b16 %v1496
      %v1533 = vunpack.c.l.b16 %v1497
      %v1534 = vunpack.c.l.b16 %v1498
      %v1535 = vunpack.c.l.b16 %v1499
      %v1536 = vunpack.c.l.b16 %v1500
      %v1537 = vunpack.c.l.b16 %v1501
      %v1538 = vunpack.c.l.b16 %v1502
      %v1539 = vpack.c.b16 %v1524, %v1523
      %v1540 = vpack.c.b16 %v1526, %v1525
      %v1541 = vpack.c.b16 %v1528, %v1527
      %v1542 = vpack.c.b16 %v1530, %v1529
      %v1543 = vpack.c.b16 %v1532, %v1531
      %v1544 = vpack.c.b16 %v1534, %v1533
      %v1545 = vpack.c.b16 %v1536, %v1535
      %v1546 = vpack.c.b16 %v1538, %v1537
      %1555 = vmatpush.bf16.msra.mxu0 %v1546
      %1556 = vmatpush.bf16.msra.mxu0 %v1545
      %1557 = vmatpush.bf16.msra.mxu0 %v1544
      %1558 = vmatpush.bf16.msra.mxu0 %v1543
      %1559 = vmatpush.bf16.msra.mxu0 %v1542
      %1560 = vmatpush.bf16.msra.mxu0 %v1541
      %1561 = vmatpush.bf16.msra.mxu0 %v1540
      %1562 = vmatpush.bf16.msra.mxu0 %v1539
      %1563 = vmatmul.bf16.gmra.mxu0 %v1486
      %v1564 = vpop.f32.mrf.mxu0
      %v1565 = vadd.f32 %v1505, %v1564
      %v1566 = vpop.f32.mrf.mxu0
      %1567 = vdwg.mxu0
      %1568 = vst [vmem:[#allocation6] sm:$0x3] %v1565
    $region33: #{phase_net_forward.3} parent=1 // pred_fallthru
      _
    // Predicated region
    $region34: #{phase_net_forward.3} parent=1 // pred_check
      _
    $region35: #{phase_net_forward.3} parent=1 // pred_check_branch
      %1570 = sbr.rel (0) target = $region37
    $region36: #{phase_net_forward.3} parent=1 // pred_region
      %1572 = vsyncadd [#allocation5], 0
      %s1574 = sshll.u32 [#allocation6], 4
      %s1575 = int_to_ptr.vmem [resolvable:$true] %s1574
      %s1576 = sshll.u32 %s5, 4
      %s1577 = int_to_ptr.hbm [resolvable:$true] %s1576
      %1579 = dma.vmem_to_hbm [thread:$0]  %s1575, 32, %s1577, [#allocation5]
    $region37: #{phase_net_forward.3} parent=1 // pred_fallthru
      _
    // Predicated region
    $region38: #{phase_net_forward.3} parent=1 // pred_check
      _
    $region39: #{phase_net_forward.3} parent=1 // pred_check_branch
      %1581 = sbr.rel (0) target = $region41
    $region40: #{phase_net_forward.3} parent=1 // pred_region
      %1583 = dma.done [#allocation5], 32
    $region41: #{phase_net_forward.3} parent=1 // pred_fallthru
      _
    %1584 = vsyncpa [#allocation4], 1
    %1585 = vsyncpa [#allocation5], 1

</llo_original>
